<compile_context>
chip_gen: v7x
topology: tpu7x:2x2x1
jax: 0.10.0
libtpu: 0.0.40
codegen_flags: <defaults>
</compile_context>

<pallas_src>
import functools

import jax
import jax.numpy as jnp
from jax.experimental import pallas as pl
from jax.experimental.pallas import tpu as pltpu


# tap order matches w2.reshape(27, I, O) row-major flattening of (kd, kh, kw)
_TAP_OFFSETS = [(kd - 1, kh - 1, kw - 1)
                for kd in range(3) for kh in range(3) for kw in range(3)]


def _tap_masks(D, H, W):
    """(27, D*H*W) float32 {0,1}: lanes where each 3x3x3 tap reads inside the volume."""
    d = jnp.arange(D)[:, None, None]
    h = jnp.arange(H)[None, :, None]
    w = jnp.arange(W)[None, None, :]
    rows = []
    for dd, dh, dw in _TAP_OFFSETS:
        valid = ((d + dd >= 0) & (d + dd < D) &
                 (h + dh >= 0) & (h + dh < H) &
                 (w + dw >= 0) & (w + dw < W))
        rows.append(valid.reshape(-1))
    return jnp.stack(rows).astype(jnp.float32)


# ------------------------------ fused kernel -------------------------------- #

def _bottleneck_kernel(x_ref, w1d_ref, s1d_ref, b1d_ref,
                       w2_ref, s2_ref, b2_ref,
                       w3_ref, s3_ref, b3_ref, mask_ref,
                       o_ref, col_ref, *, D, H, W, mid):
    """One batch element, transposed (C, M) layout with M = D*H*W on lanes."""
    M = D * H * W

    # ---- fused 1x1 convs: main branch (first `mid` rows) + downsample branch ----
    x = x_ref[...].astype(jnp.bfloat16)                                   # (cin, M)
    y = jnp.dot(w1d_ref[...], x, preferred_element_type=jnp.float32)      # (mid+cout, M)
    y = y * s1d_ref[...] + b1d_ref[...]                                   # folded BN
    h1 = jnp.maximum(y[:mid, :], 0.0)                                     # (mid, M)
    o_ref[...] = y[mid:, :]          # park residual branch (no ReLU) in the output VMEM buffer

    # ---- 3x3x3 'same' conv as a single im2col matmul ----------------------------
    # col[k*mid + i, m] = h1[i, m + off_k], zeroed where the tap falls outside the
    # volume (equivalent to zero padding).  Lane rolls run on the XLU; masks are host-built.
    for k, (dd, dh, dw) in enumerate(_TAP_OFFSETS):
        off = dd * H * W + dh * W + dw
        shifted = h1 if off == 0 else pltpu.roll(h1, shift=(-off) % M, axis=1)
        valid = mask_ref[pl.ds(k, 1), :]                                  # (1, M)
        col_ref[pl.ds(k * mid, mid), :] = shifted * valid

    h2 = jnp.dot(w2_ref[...], col_ref[...].astype(jnp.bfloat16),
                 preferred_element_type=jnp.float32)                      # (mid, M), K = 27*mid
    h2 = jnp.maximum(h2 * s2_ref[...] + b2_ref[...], 0.0)

    # ---- final 1x1 conv + BN + ReLU, then residual add ---------------------------
    h3 = jnp.dot(w3_ref[...], h2.astype(jnp.bfloat16),
                 preferred_element_type=jnp.float32)                      # (cout, M)
    h3 = jnp.maximum(h3 * s3_ref[...] + b3_ref[...], 0.0)
    o_ref[...] = o_ref[...] + h3


# -------------------------------- wrapper ------------------------------------ #

def bottleneck_forward(x, p):
    """x: (N, Cin, D, H, W) float32 -> (N, Cout, D, H, W) float32."""
    N, cin, D, H, W = x.shape
    M = D * H * W
    mid = p["w1"].shape[1]
    cout = p["w3"].shape[1]

    # layout / weight plumbing (XLA-side, negligible): transpose weights so the kernel
    # computes W^T @ X with the long spatial axis on the 128-lane dim.
    x2 = x.reshape(N, cin, M)
    w1d = jnp.concatenate([p["w1"], p["wd"]], axis=1).T.astype(jnp.bfloat16)   # (mid+cout, cin)
    s1d = jnp.concatenate([p["s1"], p["sd"]]).reshape(mid + cout, 1)
    b1d = jnp.concatenate([p["b1"], p["bd"]]).reshape(mid + cout, 1)
    # (3,3,3,I,O) -> (O, 27*I), tap-major, matching the kernel's im2col row order.
    w2t = (p["w2"].reshape(27, mid, mid).transpose(2, 0, 1)
           .reshape(mid, 27 * mid).astype(jnp.bfloat16))
    w3t = p["w3"].T.astype(jnp.bfloat16)                                        # (cout, mid)
    masks = _tap_masks(D, H, W)

    kernel = functools.partial(_bottleneck_kernel, D=D, H=H, W=W, mid=mid)
    full = lambda n: (0, 0)
    out = pl.pallas_call(
        kernel,
        out_shape=jax.ShapeDtypeStruct((N, cout, M), jnp.float32),
        grid=(N,),
        in_specs=[
            pl.BlockSpec((None, cin, M), lambda n: (n, 0, 0)),   # x (per batch)
            pl.BlockSpec((mid + cout, cin), full),               # [w1 | wd]^T
            pl.BlockSpec((mid + cout, 1), full),                 # BN1/BNd scale
            pl.BlockSpec((mid + cout, 1), full),                 # BN1/BNd shift
            pl.BlockSpec((mid, 27 * mid), full),                 # 3x3x3 weights (im2col form)
            pl.BlockSpec((mid, 1), full),                        # BN2 scale
            pl.BlockSpec((mid, 1), full),                        # BN2 shift
            pl.BlockSpec((cout, mid), full),                     # w3^T
            pl.BlockSpec((cout, 1), full),                       # BN3 scale
            pl.BlockSpec((cout, 1), full),                       # BN3 shift
            pl.BlockSpec((27, M), full),                         # tap validity masks
        ],
        out_specs=pl.BlockSpec((None, cout, M), lambda n: (n, 0, 0)),
        scratch_shapes=[pltpu.VMEM((27 * mid, M), jnp.float32)],  # im2col slab
        compiler_params=pltpu.CompilerParams(dimension_semantics=("parallel",)),
    )(x2, w1d, s1d, b1d, w2t,
      p["s2"].reshape(mid, 1), p["b2"].reshape(mid, 1),
      w3t, p["s3"].reshape(cout, 1), p["b3"].reshape(cout, 1), masks)
    return out.reshape(N, cout, D, H, W)


# ------------------------- parameters (deterministic) ------------------------ #

def _folded_bn(key, c):
    k1, k2, k3, k4 = jax.random.split(key, 4)
    gamma = 1.0 + 0.1 * jax.random.normal(k1, (c,), jnp.float32)
    beta = 0.1 * jax.random.normal(k2, (c,), jnp.float32)
    mean = 0.1 * jax.random.normal(k3, (c,), jnp.float32)
    var = jnp.abs(jax.random.normal(k4, (c,), jnp.float32)) + 0.5
    scale = gamma / jnp.sqrt(var + 1e-5)
    shift = beta - mean * scale
    return scale, shift


def init_params(key, input_nc, output_nc, reduction=4):
    mid = output_nc // reduction
    ks = jax.random.split(key, 8)
    p = {}
    # Conv3d(input_nc, mid, k=1, bias=False) + BN
    p["w1"] = jax.random.normal(ks[0], (input_nc, mid), jnp.float32) / jnp.sqrt(input_nc)
    p["s1"], p["b1"] = _folded_bn(ks[1], mid)
    # convolution(mid, mid, k=3, bias=False) + BN   (DHWIO)
    p["w2"] = jax.random.normal(ks[2], (3, 3, 3, mid, mid), jnp.float32) / jnp.sqrt(27 * mid)
    p["s2"], p["b2"] = _folded_bn(ks[3], mid)
    # Conv3d(mid, output_nc, k=1, bias=False) + BN
    p["w3"] = jax.random.normal(ks[4], (mid, output_nc), jnp.float32) / jnp.sqrt(mid)
    p["s3"], p["b3"] = _folded_bn(ks[5], output_nc)
    # downsample: convolution(input_nc, output_nc, k=1, bias=False) + BN (no ReLU)
    p["wd"] = jax.random.normal(ks[6], (input_nc, output_nc), jnp.float32) / jnp.sqrt(input_nc)
    p["sd"], p["bd"] = _folded_bn(ks[7], output_nc)
    return p


# ------------------------------ pure-JAX reference ---------------------------- #

def reference_forward(x, p):
    def bn(y, s, b):
        return y * s.reshape(1, -1, 1, 1, 1) + b.reshape(1, -1, 1, 1, 1)
    h1 = jnp.maximum(bn(jnp.einsum("ncdhw,co->nodhw", x, p["w1"]), p["s1"], p["b1"]), 0.0)
    h2 = jax.lax.conv_general_dilated(
        h1, p["w2"], (1, 1, 1), "SAME",
        dimension_numbers=("NCDHW", "DHWIO", "NCDHW"))
    h2 = jnp.maximum(bn(h2, p["s2"], p["b2"]), 0.0)
    h3 = jnp.maximum(bn(jnp.einsum("ncdhw,co->nodhw", h2, p["w3"]), p["s3"], p["b3"]), 0.0)
    res = bn(jnp.einsum("ncdhw,co->nodhw", x, p["wd"]), p["sd"], p["bd"])
    return h3 + res          # module applies block ReLU before the residual add


# ---------------------------------- main -------------------------------------- #

if __name__ == "__main__":
    key = jax.random.PRNGKey(0)
    kx, kp = jax.random.split(key)

    N, D, H, W = 2, 8, 8, 8
    input_nc, output_nc, reduction = 8, 32, 4   # mid = 8; input_nc != output_nc -> downsample

    x = jax.random.normal(kx, (N, input_nc, D, H, W), jnp.float32)
    params = init_params(kp, input_nc, output_nc, reduction)

    fwd = jax.jit(bottleneck_forward)
    out = jax.block_until_ready(fwd(x, params))
    ref = jax.block_until_ready(reference_forward(x, params))

    assert out.shape == (N, output_nc, D, H, W)
    err = float(jnp.max(jnp.abs(out - ref)))
    assert jnp.allclose(out, ref, atol=5e-2, rtol=5e-2), f"max abs err = {err}"

    print("KERNEL_OK")
</pallas_src>

<mosaic_0001>
module attributes {stable_mosaic.version = 11 : i64} {
  func.func @_bottleneck_kernel(%arg0: i32, %arg1: memref<1x8x512xf32, #tpu.memory_space<vmem>>, %arg2: memref<40x8xbf16, #tpu.memory_space<vmem>>, %arg3: memref<40x1xf32, #tpu.memory_space<vmem>>, %arg4: memref<40x1xf32, #tpu.memory_space<vmem>>, %arg5: memref<8x216xbf16, #tpu.memory_space<vmem>>, %arg6: memref<8x1xf32, #tpu.memory_space<vmem>>, %arg7: memref<8x1xf32, #tpu.memory_space<vmem>>, %arg8: memref<32x8xbf16, #tpu.memory_space<vmem>>, %arg9: memref<32x1xf32, #tpu.memory_space<vmem>>, %arg10: memref<32x1xf32, #tpu.memory_space<vmem>>, %arg11: memref<27x512xf32, #tpu.memory_space<vmem>>, %arg12: memref<1x32x512xf32, #tpu.memory_space<vmem>>, %arg13: memref<216x512xf32, #tpu.memory_space<vmem>>) attributes {dimension_semantics = [#tpu.dimension_semantics<parallel>], iteration_bounds = array<i64: 2>, scalar_prefetch = 0 : i64, scratch_operands = 1 : i64, tpu.core_type = #tpu.core_type<tc>, window_params = [{transform_indices = @transform_0, window_bounds = array<i64: 1, 8, 512>}, {pipeline_mode = #tpu.pipeline_mode<synchronous>, transform_indices = @transform_1, window_bounds = array<i64: 40, 8>}, {pipeline_mode = #tpu.pipeline_mode<synchronous>, transform_indices = @transform_2, window_bounds = array<i64: 40, 1>}, {pipeline_mode = #tpu.pipeline_mode<synchronous>, transform_indices = @transform_3, window_bounds = array<i64: 40, 1>}, {pipeline_mode = #tpu.pipeline_mode<synchronous>, transform_indices = @transform_4, window_bounds = array<i64: 8, 216>}, {pipeline_mode = #tpu.pipeline_mode<synchronous>, transform_indices = @transform_5, window_bounds = array<i64: 8, 1>}, {pipeline_mode = #tpu.pipeline_mode<synchronous>, transform_indices = @transform_6, window_bounds = array<i64: 8, 1>}, {pipeline_mode = #tpu.pipeline_mode<synchronous>, transform_indices = @transform_7, window_bounds = array<i64: 32, 8>}, {pipeline_mode = #tpu.pipeline_mode<synchronous>, transform_indices = @transform_8, window_bounds = array<i64: 32, 1>}, {pipeline_mode = #tpu.pipeline_mode<synchronous>, transform_indices = @transform_9, window_bounds = array<i64: 32, 1>}, {pipeline_mode = #tpu.pipeline_mode<synchronous>, transform_indices = @transform_10, window_bounds = array<i64: 27, 512>}, {transform_indices = @transform_11, window_bounds = array<i64: 1, 32, 512>}]} {
    %c0 = arith.constant 0 : index
    %c0_0 = arith.constant 0 : index
    %c0_1 = arith.constant 0 : index
    %0 = vector.load %arg1[%c0, %c0_0, %c0_1] : memref<1x8x512xf32, #tpu.memory_space<vmem>>, vector<1x8x512xf32>
    %1 = vector.shape_cast %0 : vector<1x8x512xf32> to vector<8x512xf32>
    %2 = arith.truncf %1 : vector<8x512xf32> to vector<8x512xbf16>
    %c0_2 = arith.constant 0 : index
    %c0_3 = arith.constant 0 : index
    %3 = vector.load %arg2[%c0_2, %c0_3] : memref<40x8xbf16, #tpu.memory_space<vmem>>, vector<40x8xbf16>
    %cst = arith.constant dense<0.000000e+00> : vector<40x512xf32>
    %4 = tpu.matmul %3, %2, %cst {dimension_numbers = #tpu.dot_dimension_numbers<[1], [0], [0], [1], [0, 0, 1, 1], [], []>} : vector<40x8xbf16>, vector<8x512xbf16>, vector<40x512xf32> -> vector<40x512xf32>
    %c0_4 = arith.constant 0 : index
    %c0_5 = arith.constant 0 : index
    %5 = vector.load %arg3[%c0_4, %c0_5] : memref<40x1xf32, #tpu.memory_space<vmem>>, vector<40x1xf32>
    %6 = vector.broadcast %5 : vector<40x1xf32> to vector<40x512xf32>
    %7 = arith.mulf %4, %6 : vector<40x512xf32>
    %c0_6 = arith.constant 0 : index
    %c0_7 = arith.constant 0 : index
    %8 = vector.load %arg4[%c0_6, %c0_7] : memref<40x1xf32, #tpu.memory_space<vmem>>, vector<40x1xf32>
    %9 = vector.broadcast %8 : vector<40x1xf32> to vector<40x512xf32>
    %10 = arith.addf %7, %9 : vector<40x512xf32>
    %11 = vector.extract_strided_slice %10 {offsets = [0, 0], sizes = [8, 512], strides = [1, 1]} : vector<40x512xf32> to vector<8x512xf32>
    %cst_8 = arith.constant 0.000000e+00 : f32
    %12 = vector.broadcast %cst_8 : f32 to vector<8x512xf32>
    %13 = arith.maximumf %11, %12 : vector<8x512xf32>
    %14 = vector.extract_strided_slice %10 {offsets = [8, 0], sizes = [32, 512], strides = [1, 1]} : vector<40x512xf32> to vector<32x512xf32>
    %c0_9 = arith.constant 0 : index
    %c0_10 = arith.constant 0 : index
    %c0_11 = arith.constant 0 : index
    %15 = vector.load %arg12[%c0_9, %c0_10, %c0_11] : memref<1x32x512xf32, #tpu.memory_space<vmem>>, vector<1x32x512xf32>
    %16 = vector.shape_cast %15 : vector<1x32x512xf32> to vector<32x512xf32>
    %17 = vector.shape_cast %14 : vector<32x512xf32> to vector<1x32x512xf32>
    tpu.vector_store %arg12[%c0_9, %c0_10, %c0_11], %17 {strides = array<i32>} : memref<1x32x512xf32, #tpu.memory_space<vmem>>, vector<1x32x512xf32>,
    %c73_i32 = arith.constant 73 : i32
    %18 = tpu.dynamic_rotate %13 by %c73_i32 dim 1 : vector<8x512xf32>, i32 -> vector<8x512xf32>
    %c0_12 = arith.constant 0 : index
    %c0_13 = arith.constant 0 : index
    %19 = vector.load %arg11[%c0_12, %c0_13] : memref<27x512xf32, #tpu.memory_space<vmem>>, vector<1x512xf32>
    %20 = vector.broadcast %19 : vector<1x512xf32> to vector<8x512xf32>
    %21 = arith.mulf %18, %20 : vector<8x512xf32>
    %c0_14 = arith.constant 0 : index
    %c0_15 = arith.constant 0 : index
    %22 = vector.load %arg13[%c0_14, %c0_15] : memref<216x512xf32, #tpu.memory_space<vmem>>, vector<8x512xf32>
    tpu.vector_store %arg13[%c0_14, %c0_15], %21 {strides = array<i32>} : memref<216x512xf32, #tpu.memory_space<vmem>>, vector<8x512xf32>,
    %c72_i32 = arith.constant 72 : i32
    %23 = tpu.dynamic_rotate %13 by %c72_i32 dim 1 : vector<8x512xf32>, i32 -> vector<8x512xf32>
    %c1 = arith.constant 1 : index
    %c0_16 = arith.constant 0 : index
    %24 = vector.load %arg11[%c1, %c0_16] : memref<27x512xf32, #tpu.memory_space<vmem>>, vector<1x512xf32>
    %25 = vector.broadcast %24 : vector<1x512xf32> to vector<8x512xf32>
    %26 = arith.mulf %23, %25 : vector<8x512xf32>
    %c8 = arith.constant 8 : index
    %c0_17 = arith.constant 0 : index
    %27 = vector.load %arg13[%c8, %c0_17] : memref<216x512xf32, #tpu.memory_space<vmem>>, vector<8x512xf32>
    tpu.vector_store %arg13[%c8, %c0_17], %26 {strides = array<i32>} : memref<216x512xf32, #tpu.memory_space<vmem>>, vector<8x512xf32>,
    %c71_i32 = arith.constant 71 : i32
    %28 = tpu.dynamic_rotate %13 by %c71_i32 dim 1 : vector<8x512xf32>, i32 -> vector<8x512xf32>
    %c2 = arith.constant 2 : index
    %c0_18 = arith.constant 0 : index
    %29 = vector.load %arg11[%c2, %c0_18] : memref<27x512xf32, #tpu.memory_space<vmem>>, vector<1x512xf32>
    %30 = vector.broadcast %29 : vector<1x512xf32> to vector<8x512xf32>
    %31 = arith.mulf %28, %30 : vector<8x512xf32>
    %c16 = arith.constant 16 : index
    %c0_19 = arith.constant 0 : index
    %32 = vector.load %arg13[%c16, %c0_19] : memref<216x512xf32, #tpu.memory_space<vmem>>, vector<8x512xf32>
    tpu.vector_store %arg13[%c16, %c0_19], %31 {strides = array<i32>} : memref<216x512xf32, #tpu.memory_space<vmem>>, vector<8x512xf32>,
    %c65_i32 = arith.constant 65 : i32
    %33 = tpu.dynamic_rotate %13 by %c65_i32 dim 1 : vector<8x512xf32>, i32 -> vector<8x512xf32>
    %c3 = arith.constant 3 : index
    %c0_20 = arith.constant 0 : index
    %34 = vector.load %arg11[%c3, %c0_20] : memref<27x512xf32, #tpu.memory_space<vmem>>, vector<1x512xf32>
    %35 = vector.broadcast %34 : vector<1x512xf32> to vector<8x512xf32>
    %36 = arith.mulf %33, %35 : vector<8x512xf32>
    %c24 = arith.constant 24 : index
    %c0_21 = arith.constant 0 : index
    %37 = vector.load %arg13[%c24, %c0_21] : memref<216x512xf32, #tpu.memory_space<vmem>>, vector<8x512xf32>
    tpu.vector_store %arg13[%c24, %c0_21], %36 {strides = array<i32>} : memref<216x512xf32, #tpu.memory_space<vmem>>, vector<8x512xf32>,
    %c64_i32 = arith.constant 64 : i32
    %38 = tpu.dynamic_rotate %13 by %c64_i32 dim 1 : vector<8x512xf32>, i32 -> vector<8x512xf32>
    %c4 = arith.constant 4 : index
    %c0_22 = arith.constant 0 : index
    %39 = vector.load %arg11[%c4, %c0_22] : memref<27x512xf32, #tpu.memory_space<vmem>>, vector<1x512xf32>
    %40 = vector.broadcast %39 : vector<1x512xf32> to vector<8x512xf32>
    %41 = arith.mulf %38, %40 : vector<8x512xf32>
    %c32 = arith.constant 32 : index
    %c0_23 = arith.constant 0 : index
    %42 = vector.load %arg13[%c32, %c0_23] : memref<216x512xf32, #tpu.memory_space<vmem>>, vector<8x512xf32>
    tpu.vector_store %arg13[%c32, %c0_23], %41 {strides = array<i32>} : memref<216x512xf32, #tpu.memory_space<vmem>>, vector<8x512xf32>,
    %c63_i32 = arith.constant 63 : i32
    %43 = tpu.dynamic_rotate %13 by %c63_i32 dim 1 : vector<8x512xf32>, i32 -> vector<8x512xf32>
    %c5 = arith.constant 5 : index
    %c0_24 = arith.constant 0 : index
    %44 = vector.load %arg11[%c5, %c0_24] : memref<27x512xf32, #tpu.memory_space<vmem>>, vector<1x512xf32>
    %45 = vector.broadcast %44 : vector<1x512xf32> to vector<8x512xf32>
    %46 = arith.mulf %43, %45 : vector<8x512xf32>
    %c40 = arith.constant 40 : index
    %c0_25 = arith.constant 0 : index
    %47 = vector.load %arg13[%c40, %c0_25] : memref<216x512xf32, #tpu.memory_space<vmem>>, vector<8x512xf32>
    tpu.vector_store %arg13[%c40, %c0_25], %46 {strides = array<i32>} : memref<216x512xf32, #tpu.memory_space<vmem>>, vector<8x512xf32>,
    %c57_i32 = arith.constant 57 : i32
    %48 = tpu.dynamic_rotate %13 by %c57_i32 dim 1 : vector<8x512xf32>, i32 -> vector<8x512xf32>
    %c6 = arith.constant 6 : index
    %c0_26 = arith.constant 0 : index
    %49 = vector.load %arg11[%c6, %c0_26] : memref<27x512xf32, #tpu.memory_space<vmem>>, vector<1x512xf32>
    %50 = vector.broadcast %49 : vector<1x512xf32> to vector<8x512xf32>
    %51 = arith.mulf %48, %50 : vector<8x512xf32>
    %c48 = arith.constant 48 : index
    %c0_27 = arith.constant 0 : index
    %52 = vector.load %arg13[%c48, %c0_27] : memref<216x512xf32, #tpu.memory_space<vmem>>, vector<8x512xf32>
    tpu.vector_store %arg13[%c48, %c0_27], %51 {strides = array<i32>} : memref<216x512xf32, #tpu.memory_space<vmem>>, vector<8x512xf32>,
    %c56_i32 = arith.constant 56 : i32
    %53 = tpu.dynamic_rotate %13 by %c56_i32 dim 1 : vector<8x512xf32>, i32 -> vector<8x512xf32>
    %c7 = arith.constant 7 : index
    %c0_28 = arith.constant 0 : index
    %54 = vector.load %arg11[%c7, %c0_28] : memref<27x512xf32, #tpu.memory_space<vmem>>, vector<1x512xf32>
    %55 = vector.broadcast %54 : vector<1x512xf32> to vector<8x512xf32>
    %56 = arith.mulf %53, %55 : vector<8x512xf32>
    %c56 = arith.constant 56 : index
    %c0_29 = arith.constant 0 : index
    %57 = vector.load %arg13[%c56, %c0_29] : memref<216x512xf32, #tpu.memory_space<vmem>>, vector<8x512xf32>
    tpu.vector_store %arg13[%c56, %c0_29], %56 {strides = array<i32>} : memref<216x512xf32, #tpu.memory_space<vmem>>, vector<8x512xf32>,
    %c55_i32 = arith.constant 55 : i32
    %58 = tpu.dynamic_rotate %13 by %c55_i32 dim 1 : vector<8x512xf32>, i32 -> vector<8x512xf32>
    %c8_30 = arith.constant 8 : index
    %c0_31 = arith.constant 0 : index
    %59 = vector.load %arg11[%c8_30, %c0_31] : memref<27x512xf32, #tpu.memory_space<vmem>>, vector<1x512xf32>
    %60 = vector.broadcast %59 : vector<1x512xf32> to vector<8x512xf32>
    %61 = arith.mulf %58, %60 : vector<8x512xf32>
    %c64 = arith.constant 64 : index
    %c0_32 = arith.constant 0 : index
    %62 = vector.load %arg13[%c64, %c0_32] : memref<216x512xf32, #tpu.memory_space<vmem>>, vector<8x512xf32>
    tpu.vector_store %arg13[%c64, %c0_32], %61 {strides = array<i32>} : memref<216x512xf32, #tpu.memory_space<vmem>>, vector<8x512xf32>,
    %c9_i32 = arith.constant 9 : i32
    %63 = tpu.dynamic_rotate %13 by %c9_i32 dim 1 : vector<8x512xf32>, i32 -> vector<8x512xf32>
    %c9 = arith.constant 9 : index
    %c0_33 = arith.constant 0 : index
    %64 = vector.load %arg11[%c9, %c0_33] : memref<27x512xf32, #tpu.memory_space<vmem>>, vector<1x512xf32>
    %65 = vector.broadcast %64 : vector<1x512xf32> to vector<8x512xf32>
    %66 = arith.mulf %63, %65 : vector<8x512xf32>
    %c72 = arith.constant 72 : index
    %c0_34 = arith.constant 0 : index
    %67 = vector.load %arg13[%c72, %c0_34] : memref<216x512xf32, #tpu.memory_space<vmem>>, vector<8x512xf32>
    tpu.vector_store %arg13[%c72, %c0_34], %66 {strides = array<i32>} : memref<216x512xf32, #tpu.memory_space<vmem>>, vector<8x512xf32>,
    %c8_i32 = arith.constant 8 : i32
    %68 = tpu.dynamic_rotate %13 by %c8_i32 dim 1 : vector<8x512xf32>, i32 -> vector<8x512xf32>
    %c10 = arith.constant 10 : index
    %c0_35 = arith.constant 0 : index
    %69 = vector.load %arg11[%c10, %c0_35] : memref<27x512xf32, #tpu.memory_space<vmem>>, vector<1x512xf32>
    %70 = vector.broadcast %69 : vector<1x512xf32> to vector<8x512xf32>
    %71 = arith.mulf %68, %70 : vector<8x512xf32>
    %c80 = arith.constant 80 : index
    %c0_36 = arith.constant 0 : index
    %72 = vector.load %arg13[%c80, %c0_36] : memref<216x512xf32, #tpu.memory_space<vmem>>, vector<8x512xf32>
    tpu.vector_store %arg13[%c80, %c0_36], %71 {strides = array<i32>} : memref<216x512xf32, #tpu.memory_space<vmem>>, vector<8x512xf32>,
    %c7_i32 = arith.constant 7 : i32
    %73 = tpu.dynamic_rotate %13 by %c7_i32 dim 1 : vector<8x512xf32>, i32 -> vector<8x512xf32>
    %c11 = arith.constant 11 : index
    %c0_37 = arith.constant 0 : index
    %74 = vector.load %arg11[%c11, %c0_37] : memref<27x512xf32, #tpu.memory_space<vmem>>, vector<1x512xf32>
    %75 = vector.broadcast %74 : vector<1x512xf32> to vector<8x512xf32>
    %76 = arith.mulf %73, %75 : vector<8x512xf32>
    %c88 = arith.constant 88 : index
    %c0_38 = arith.constant 0 : index
    %77 = vector.load %arg13[%c88, %c0_38] : memref<216x512xf32, #tpu.memory_space<vmem>>, vector<8x512xf32>
    tpu.vector_store %arg13[%c88, %c0_38], %76 {strides = array<i32>} : memref<216x512xf32, #tpu.memory_space<vmem>>, vector<8x512xf32>,
    %c1_i32 = arith.constant 1 : i32
    %78 = tpu.dynamic_rotate %13 by %c1_i32 dim 1 : vector<8x512xf32>, i32 -> vector<8x512xf32>
    %c12 = arith.constant 12 : index
    %c0_39 = arith.constant 0 : index
    %79 = vector.load %arg11[%c12, %c0_39] : memref<27x512xf32, #tpu.memory_space<vmem>>, vector<1x512xf32>
    %80 = vector.broadcast %79 : vector<1x512xf32> to vector<8x512xf32>
    %81 = arith.mulf %78, %80 : vector<8x512xf32>
    %c96 = arith.constant 96 : index
    %c0_40 = arith.constant 0 : index
    %82 = vector.load %arg13[%c96, %c0_40] : memref<216x512xf32, #tpu.memory_space<vmem>>, vector<8x512xf32>
    tpu.vector_store %arg13[%c96, %c0_40], %81 {strides = array<i32>} : memref<216x512xf32, #tpu.memory_space<vmem>>, vector<8x512xf32>,
    %c13 = arith.constant 13 : index
    %c0_41 = arith.constant 0 : index
    %83 = vector.load %arg11[%c13, %c0_41] : memref<27x512xf32, #tpu.memory_space<vmem>>, vector<1x512xf32>
    %84 = vector.broadcast %83 : vector<1x512xf32> to vector<8x512xf32>
    %85 = arith.mulf %13, %84 : vector<8x512xf32>
    %c104 = arith.constant 104 : index
    %c0_42 = arith.constant 0 : index
    %86 = vector.load %arg13[%c104, %c0_42] : memref<216x512xf32, #tpu.memory_space<vmem>>, vector<8x512xf32>
    tpu.vector_store %arg13[%c104, %c0_42], %85 {strides = array<i32>} : memref<216x512xf32, #tpu.memory_space<vmem>>, vector<8x512xf32>,
    %c511_i32 = arith.constant 511 : i32
    %87 = tpu.dynamic_rotate %13 by %c511_i32 dim 1 : vector<8x512xf32>, i32 -> vector<8x512xf32>
    %c14 = arith.constant 14 : index
    %c0_43 = arith.constant 0 : index
    %88 = vector.load %arg11[%c14, %c0_43] : memref<27x512xf32, #tpu.memory_space<vmem>>, vector<1x512xf32>
    %89 = vector.broadcast %88 : vector<1x512xf32> to vector<8x512xf32>
    %90 = arith.mulf %87, %89 : vector<8x512xf32>
    %c112 = arith.constant 112 : index
    %c0_44 = arith.constant 0 : index
    %91 = vector.load %arg13[%c112, %c0_44] : memref<216x512xf32, #tpu.memory_space<vmem>>, vector<8x512xf32>
    tpu.vector_store %arg13[%c112, %c0_44], %90 {strides = array<i32>} : memref<216x512xf32, #tpu.memory_space<vmem>>, vector<8x512xf32>,
    %c505_i32 = arith.constant 505 : i32
    %92 = tpu.dynamic_rotate %13 by %c505_i32 dim 1 : vector<8x512xf32>, i32 -> vector<8x512xf32>
    %c15 = arith.constant 15 : index
    %c0_45 = arith.constant 0 : index
    %93 = vector.load %arg11[%c15, %c0_45] : memref<27x512xf32, #tpu.memory_space<vmem>>, vector<1x512xf32>
    %94 = vector.broadcast %93 : vector<1x512xf32> to vector<8x512xf32>
    %95 = arith.mulf %92, %94 : vector<8x512xf32>
    %c120 = arith.constant 120 : index
    %c0_46 = arith.constant 0 : index
    %96 = vector.load %arg13[%c120, %c0_46] : memref<216x512xf32, #tpu.memory_space<vmem>>, vector<8x512xf32>
    tpu.vector_store %arg13[%c120, %c0_46], %95 {strides = array<i32>} : memref<216x512xf32, #tpu.memory_space<vmem>>, vector<8x512xf32>,
    %c504_i32 = arith.constant 504 : i32
    %97 = tpu.dynamic_rotate %13 by %c504_i32 dim 1 : vector<8x512xf32>, i32 -> vector<8x512xf32>
    %c16_47 = arith.constant 16 : index
    %c0_48 = arith.constant 0 : index
    %98 = vector.load %arg11[%c16_47, %c0_48] : memref<27x512xf32, #tpu.memory_space<vmem>>, vector<1x512xf32>
    %99 = vector.broadcast %98 : vector<1x512xf32> to vector<8x512xf32>
    %100 = arith.mulf %97, %99 : vector<8x512xf32>
    %c128 = arith.constant 128 : index
    %c0_49 = arith.constant 0 : index
    %101 = vector.load %arg13[%c128, %c0_49] : memref<216x512xf32, #tpu.memory_space<vmem>>, vector<8x512xf32>
    tpu.vector_store %arg13[%c128, %c0_49], %100 {strides = array<i32>} : memref<216x512xf32, #tpu.memory_space<vmem>>, vector<8x512xf32>,
    %c503_i32 = arith.constant 503 : i32
    %102 = tpu.dynamic_rotate %13 by %c503_i32 dim 1 : vector<8x512xf32>, i32 -> vector<8x512xf32>
    %c17 = arith.constant 17 : index
    %c0_50 = arith.constant 0 : index
    %103 = vector.load %arg11[%c17, %c0_50] : memref<27x512xf32, #tpu.memory_space<vmem>>, vector<1x512xf32>
    %104 = vector.broadcast %103 : vector<1x512xf32> to vector<8x512xf32>
    %105 = arith.mulf %102, %104 : vector<8x512xf32>
    %c136 = arith.constant 136 : index
    %c0_51 = arith.constant 0 : index
    %106 = vector.load %arg13[%c136, %c0_51] : memref<216x512xf32, #tpu.memory_space<vmem>>, vector<8x512xf32>
    tpu.vector_store %arg13[%c136, %c0_51], %105 {strides = array<i32>} : memref<216x512xf32, #tpu.memory_space<vmem>>, vector<8x512xf32>,
    %c457_i32 = arith.constant 457 : i32
    %107 = tpu.dynamic_rotate %13 by %c457_i32 dim 1 : vector<8x512xf32>, i32 -> vector<8x512xf32>
    %c18 = arith.constant 18 : index
    %c0_52 = arith.constant 0 : index
    %108 = vector.load %arg11[%c18, %c0_52] : memref<27x512xf32, #tpu.memory_space<vmem>>, vector<1x512xf32>
    %109 = vector.broadcast %108 : vector<1x512xf32> to vector<8x512xf32>
    %110 = arith.mulf %107, %109 : vector<8x512xf32>
    %c144 = arith.constant 144 : index
    %c0_53 = arith.constant 0 : index
    %111 = vector.load %arg13[%c144, %c0_53] : memref<216x512xf32, #tpu.memory_space<vmem>>, vector<8x512xf32>
    tpu.vector_store %arg13[%c144, %c0_53], %110 {strides = array<i32>} : memref<216x512xf32, #tpu.memory_space<vmem>>, vector<8x512xf32>,
    %c456_i32 = arith.constant 456 : i32
    %112 = tpu.dynamic_rotate %13 by %c456_i32 dim 1 : vector<8x512xf32>, i32 -> vector<8x512xf32>
    %c19 = arith.constant 19 : index
    %c0_54 = arith.constant 0 : index
    %113 = vector.load %arg11[%c19, %c0_54] : memref<27x512xf32, #tpu.memory_space<vmem>>, vector<1x512xf32>
    %114 = vector.broadcast %113 : vector<1x512xf32> to vector<8x512xf32>
    %115 = arith.mulf %112, %114 : vector<8x512xf32>
    %c152 = arith.constant 152 : index
    %c0_55 = arith.constant 0 : index
    %116 = vector.load %arg13[%c152, %c0_55] : memref<216x512xf32, #tpu.memory_space<vmem>>, vector<8x512xf32>
    tpu.vector_store %arg13[%c152, %c0_55], %115 {strides = array<i32>} : memref<216x512xf32, #tpu.memory_space<vmem>>, vector<8x512xf32>,
    %c455_i32 = arith.constant 455 : i32
    %117 = tpu.dynamic_rotate %13 by %c455_i32 dim 1 : vector<8x512xf32>, i32 -> vector<8x512xf32>
    %c20 = arith.constant 20 : index
    %c0_56 = arith.constant 0 : index
    %118 = vector.load %arg11[%c20, %c0_56] : memref<27x512xf32, #tpu.memory_space<vmem>>, vector<1x512xf32>
    %119 = vector.broadcast %118 : vector<1x512xf32> to vector<8x512xf32>
    %120 = arith.mulf %117, %119 : vector<8x512xf32>
    %c160 = arith.constant 160 : index
    %c0_57 = arith.constant 0 : index
    %121 = vector.load %arg13[%c160, %c0_57] : memref<216x512xf32, #tpu.memory_space<vmem>>, vector<8x512xf32>
    tpu.vector_store %arg13[%c160, %c0_57], %120 {strides = array<i32>} : memref<216x512xf32, #tpu.memory_space<vmem>>, vector<8x512xf32>,
    %c449_i32 = arith.constant 449 : i32
    %122 = tpu.dynamic_rotate %13 by %c449_i32 dim 1 : vector<8x512xf32>, i32 -> vector<8x512xf32>
    %c21 = arith.constant 21 : index
    %c0_58 = arith.constant 0 : index
    %123 = vector.load %arg11[%c21, %c0_58] : memref<27x512xf32, #tpu.memory_space<vmem>>, vector<1x512xf32>
    %124 = vector.broadcast %123 : vector<1x512xf32> to vector<8x512xf32>
    %125 = arith.mulf %122, %124 : vector<8x512xf32>
    %c168 = arith.constant 168 : index
    %c0_59 = arith.constant 0 : index
    %126 = vector.load %arg13[%c168, %c0_59] : memref<216x512xf32, #tpu.memory_space<vmem>>, vector<8x512xf32>
    tpu.vector_store %arg13[%c168, %c0_59], %125 {strides = array<i32>} : memref<216x512xf32, #tpu.memory_space<vmem>>, vector<8x512xf32>,
    %c448_i32 = arith.constant 448 : i32
    %127 = tpu.dynamic_rotate %13 by %c448_i32 dim 1 : vector<8x512xf32>, i32 -> vector<8x512xf32>
    %c22 = arith.constant 22 : index
    %c0_60 = arith.constant 0 : index
    %128 = vector.load %arg11[%c22, %c0_60] : memref<27x512xf32, #tpu.memory_space<vmem>>, vector<1x512xf32>
    %129 = vector.broadcast %128 : vector<1x512xf32> to vector<8x512xf32>
    %130 = arith.mulf %127, %129 : vector<8x512xf32>
    %c176 = arith.constant 176 : index
    %c0_61 = arith.constant 0 : index
    %131 = vector.load %arg13[%c176, %c0_61] : memref<216x512xf32, #tpu.memory_space<vmem>>, vector<8x512xf32>
    tpu.vector_store %arg13[%c176, %c0_61], %130 {strides = array<i32>} : memref<216x512xf32, #tpu.memory_space<vmem>>, vector<8x512xf32>,
    %c447_i32 = arith.constant 447 : i32
    %132 = tpu.dynamic_rotate %13 by %c447_i32 dim 1 : vector<8x512xf32>, i32 -> vector<8x512xf32>
    %c23 = arith.constant 23 : index
    %c0_62 = arith.constant 0 : index
    %133 = vector.load %arg11[%c23, %c0_62] : memref<27x512xf32, #tpu.memory_space<vmem>>, vector<1x512xf32>
    %134 = vector.broadcast %133 : vector<1x512xf32> to vector<8x512xf32>
    %135 = arith.mulf %132, %134 : vector<8x512xf32>
    %c184 = arith.constant 184 : index
    %c0_63 = arith.constant 0 : index
    %136 = vector.load %arg13[%c184, %c0_63] : memref<216x512xf32, #tpu.memory_space<vmem>>, vector<8x512xf32>
    tpu.vector_store %arg13[%c184, %c0_63], %135 {strides = array<i32>} : memref<216x512xf32, #tpu.memory_space<vmem>>, vector<8x512xf32>,
    %c441_i32 = arith.constant 441 : i32
    %137 = tpu.dynamic_rotate %13 by %c441_i32 dim 1 : vector<8x512xf32>, i32 -> vector<8x512xf32>
    %c24_64 = arith.constant 24 : index
    %c0_65 = arith.constant 0 : index
    %138 = vector.load %arg11[%c24_64, %c0_65] : memref<27x512xf32, #tpu.memory_space<vmem>>, vector<1x512xf32>
    %139 = vector.broadcast %138 : vector<1x512xf32> to vector<8x512xf32>
    %140 = arith.mulf %137, %139 : vector<8x512xf32>
    %c192 = arith.constant 192 : index
    %c0_66 = arith.constant 0 : index
    %141 = vector.load %arg13[%c192, %c0_66] : memref<216x512xf32, #tpu.memory_space<vmem>>, vector<8x512xf32>
    tpu.vector_store %arg13[%c192, %c0_66], %140 {strides = array<i32>} : memref<216x512xf32, #tpu.memory_space<vmem>>, vector<8x512xf32>,
    %c440_i32 = arith.constant 440 : i32
    %142 = tpu.dynamic_rotate %13 by %c440_i32 dim 1 : vector<8x512xf32>, i32 -> vector<8x512xf32>
    %c25 = arith.constant 25 : index
    %c0_67 = arith.constant 0 : index
    %143 = vector.load %arg11[%c25, %c0_67] : memref<27x512xf32, #tpu.memory_space<vmem>>, vector<1x512xf32>
    %144 = vector.broadcast %143 : vector<1x512xf32> to vector<8x512xf32>
    %145 = arith.mulf %142, %144 : vector<8x512xf32>
    %c200 = arith.constant 200 : index
    %c0_68 = arith.constant 0 : index
    %146 = vector.load %arg13[%c200, %c0_68] : memref<216x512xf32, #tpu.memory_space<vmem>>, vector<8x512xf32>
    tpu.vector_store %arg13[%c200, %c0_68], %145 {strides = array<i32>} : memref<216x512xf32, #tpu.memory_space<vmem>>, vector<8x512xf32>,
    %c439_i32 = arith.constant 439 : i32
    %147 = tpu.dynamic_rotate %13 by %c439_i32 dim 1 : vector<8x512xf32>, i32 -> vector<8x512xf32>
    %c26 = arith.constant 26 : index
    %c0_69 = arith.constant 0 : index
    %148 = vector.load %arg11[%c26, %c0_69] : memref<27x512xf32, #tpu.memory_space<vmem>>, vector<1x512xf32>
    %149 = vector.broadcast %148 : vector<1x512xf32> to vector<8x512xf32>
    %150 = arith.mulf %147, %149 : vector<8x512xf32>
    %c208 = arith.constant 208 : index
    %c0_70 = arith.constant 0 : index
    %151 = vector.load %arg13[%c208, %c0_70] : memref<216x512xf32, #tpu.memory_space<vmem>>, vector<8x512xf32>
    tpu.vector_store %arg13[%c208, %c0_70], %150 {strides = array<i32>} : memref<216x512xf32, #tpu.memory_space<vmem>>, vector<8x512xf32>,
    %c0_71 = arith.constant 0 : index
    %c0_72 = arith.constant 0 : index
    %152 = vector.load %arg5[%c0_71, %c0_72] : memref<8x216xbf16, #tpu.memory_space<vmem>>, vector<8x216xbf16>
    %c0_73 = arith.constant 0 : index
    %c0_74 = arith.constant 0 : index
    %153 = vector.load %arg13[%c0_73, %c0_74] : memref<216x512xf32, #tpu.memory_space<vmem>>, vector<216x512xf32>
    %154 = arith.truncf %153 : vector<216x512xf32> to vector<216x512xbf16>
    %cst_75 = arith.constant dense<0.000000e+00> : vector<8x512xf32>
    %155 = tpu.matmul %152, %154, %cst_75 {dimension_numbers = #tpu.dot_dimension_numbers<[1], [0], [0], [1], [0, 0, 1, 1], [], []>} : vector<8x216xbf16>, vector<216x512xbf16>, vector<8x512xf32> -> vector<8x512xf32>
    %c0_76 = arith.constant 0 : index
    %c0_77 = arith.constant 0 : index
    %156 = vector.load %arg6[%c0_76, %c0_77] : memref<8x1xf32, #tpu.memory_space<vmem>>, vector<8x1xf32>
    %157 = vector.broadcast %156 : vector<8x1xf32> to vector<8x512xf32>
    %158 = arith.mulf %155, %157 : vector<8x512xf32>
    %c0_78 = arith.constant 0 : index
    %c0_79 = arith.constant 0 : index
    %159 = vector.load %arg7[%c0_78, %c0_79] : memref<8x1xf32, #tpu.memory_space<vmem>>, vector<8x1xf32>
    %160 = vector.broadcast %159 : vector<8x1xf32> to vector<8x512xf32>
    %161 = arith.addf %158, %160 : vector<8x512xf32>
    %cst_80 = arith.constant 0.000000e+00 : f32
    %162 = vector.broadcast %cst_80 : f32 to vector<8x512xf32>
    %163 = arith.maximumf %161, %162 : vector<8x512xf32>
    %c0_81 = arith.constant 0 : index
    %c0_82 = arith.constant 0 : index
    %164 = vector.load %arg8[%c0_81, %c0_82] : memref<32x8xbf16, #tpu.memory_space<vmem>>, vector<32x8xbf16>
    %165 = arith.truncf %163 : vector<8x512xf32> to vector<8x512xbf16>
    %cst_83 = arith.constant dense<0.000000e+00> : vector<32x512xf32>
    %166 = tpu.matmul %164, %165, %cst_83 {dimension_numbers = #tpu.dot_dimension_numbers<[1], [0], [0], [1], [0, 0, 1, 1], [], []>} : vector<32x8xbf16>, vector<8x512xbf16>, vector<32x512xf32> -> vector<32x512xf32>
    %c0_84 = arith.constant 0 : index
    %c0_85 = arith.constant 0 : index
    %167 = vector.load %arg9[%c0_84, %c0_85] : memref<32x1xf32, #tpu.memory_space<vmem>>, vector<32x1xf32>
    %168 = vector.broadcast %167 : vector<32x1xf32> to vector<32x512xf32>
    %169 = arith.mulf %166, %168 : vector<32x512xf32>
    %c0_86 = arith.constant 0 : index
    %c0_87 = arith.constant 0 : index
    %170 = vector.load %arg10[%c0_86, %c0_87] : memref<32x1xf32, #tpu.memory_space<vmem>>, vector<32x1xf32>
    %171 = vector.broadcast %170 : vector<32x1xf32> to vector<32x512xf32>
    %172 = arith.addf %169, %171 : vector<32x512xf32>
    %cst_88 = arith.constant 0.000000e+00 : f32
    %173 = vector.broadcast %cst_88 : f32 to vector<32x512xf32>
    %174 = arith.maximumf %172, %173 : vector<32x512xf32>
    %c0_89 = arith.constant 0 : index
    %c0_90 = arith.constant 0 : index
    %c0_91 = arith.constant 0 : index
    %175 = vector.load %arg12[%c0_89, %c0_90, %c0_91] : memref<1x32x512xf32, #tpu.memory_space<vmem>>, vector<1x32x512xf32>
    %176 = vector.shape_cast %175 : vector<1x32x512xf32> to vector<32x512xf32>
    %177 = arith.addf %176, %174 : vector<32x512xf32>
    %c0_92 = arith.constant 0 : index
    %c0_93 = arith.constant 0 : index
    %c0_94 = arith.constant 0 : index
    %178 = vector.load %arg12[%c0_92, %c0_93, %c0_94] : memref<1x32x512xf32, #tpu.memory_space<vmem>>, vector<1x32x512xf32>
    %179 = vector.shape_cast %178 : vector<1x32x512xf32> to vector<32x512xf32>
    %180 = vector.shape_cast %177 : vector<32x512xf32> to vector<1x32x512xf32>
    tpu.vector_store %arg12[%c0_92, %c0_93, %c0_94], %180 {strides = array<i32>} : memref<1x32x512xf32, #tpu.memory_space<vmem>>, vector<1x32x512xf32>,
    return
  }
  func.func @transform_0(%arg0: i32) -> (i32, i32, i32) {
    %c0_i32 = arith.constant 0 : i32
    %c0_i32_0 = arith.constant 0 : i32
    %c0_i32_1 = arith.constant 0 : i32
    return %arg0, %c0_i32, %c0_i32_0 : i32, i32, i32
  }
  func.func @transform_1(%arg0: i32) -> (i32, i32) {
    %c0_i32 = arith.constant 0 : i32
    %c0_i32_0 = arith.constant 0 : i32
    %c0_i32_1 = arith.constant 0 : i32
    return %c0_i32, %c0_i32_0 : i32, i32
  }
  func.func @transform_2(%arg0: i32) -> (i32, i32) {
    %c0_i32 = arith.constant 0 : i32
    %c0_i32_0 = arith.constant 0 : i32
    %c0_i32_1 = arith.constant 0 : i32
    return %c0_i32, %c0_i32_0 : i32, i32
  }
  func.func @transform_3(%arg0: i32) -> (i32, i32) {
    %c0_i32 = arith.constant 0 : i32
    %c0_i32_0 = arith.constant 0 : i32
    %c0_i32_1 = arith.constant 0 : i32
    return %c0_i32, %c0_i32_0 : i32, i32
  }
  func.func @transform_4(%arg0: i32) -> (i32, i32) {
    %c0_i32 = arith.constant 0 : i32
    %c0_i32_0 = arith.constant 0 : i32
    %c0_i32_1 = arith.constant 0 : i32
    return %c0_i32, %c0_i32_0 : i32, i32
  }
  func.func @transform_5(%arg0: i32) -> (i32, i32) {
    %c0_i32 = arith.constant 0 : i32
    %c0_i32_0 = arith.constant 0 : i32
    %c0_i32_1 = arith.constant 0 : i32
    return %c0_i32, %c0_i32_0 : i32, i32
  }
  func.func @transform_6(%arg0: i32) -> (i32, i32) {
    %c0_i32 = arith.constant 0 : i32
    %c0_i32_0 = arith.constant 0 : i32
    %c0_i32_1 = arith.constant 0 : i32
    return %c0_i32, %c0_i32_0 : i32, i32
  }
  func.func @transform_7(%arg0: i32) -> (i32, i32) {
    %c0_i32 = arith.constant 0 : i32
    %c0_i32_0 = arith.constant 0 : i32
    %c0_i32_1 = arith.constant 0 : i32
    return %c0_i32, %c0_i32_0 : i32, i32
  }
  func.func @transform_8(%arg0: i32) -> (i32, i32) {
    %c0_i32 = arith.constant 0 : i32
    %c0_i32_0 = arith.constant 0 : i32
    %c0_i32_1 = arith.constant 0 : i32
    return %c0_i32, %c0_i32_0 : i32, i32
  }
  func.func @transform_9(%arg0: i32) -> (i32, i32) {
    %c0_i32 = arith.constant 0 : i32
    %c0_i32_0 = arith.constant 0 : i32
    %c0_i32_1 = arith.constant 0 : i32
    return %c0_i32, %c0_i32_0 : i32, i32
  }
  func.func @transform_10(%arg0: i32) -> (i32, i32) {
    %c0_i32 = arith.constant 0 : i32
    %c0_i32_0 = arith.constant 0 : i32
    %c0_i32_1 = arith.constant 0 : i32
    return %c0_i32, %c0_i32_0 : i32, i32
  }
  func.func @transform_11(%arg0: i32) -> (i32, i32, i32) {
    %c0_i32 = arith.constant 0 : i32
    %c0_i32_0 = arith.constant 0 : i32
    %c0_i32_1 = arith.constant 0 : i32
    return %arg0, %c0_i32, %c0_i32_0 : i32, i32, i32
  }
}

</mosaic_0001>

<llo_original>
// kernel: bottleneck_forward.1
$region0: #{bottleneck_forward.1}
  #allocation0 [shape = 'u32[]', space=smem, size = 0x4, offset = 0x4, fixed_abs, tag = 'smem constant byte address 0x4 - core index']
  #allocation1 [shape = 'u32[144,128]{1,0:T(1,128)}', space=vmem, size = 0x12000, scoped, tag = 'internal scratch']
  #allocation2 [shape = 'f32[216,512]{1,0:T(8,128)}', space=vmem, size = 0x6c000, scoped, tag = 'scratch operand']
  %s0 = inlined_call_operand.vmem [shape: f32[2,8,512], index: 0, kind: input, shape index: {}]
  %s1 = inlined_call_operand.vmem [shape: bf16[40,8], index: 1, kind: input, shape index: {}]
  %s2 = inlined_call_operand.vmem [shape: f32[40,1], index: 2, kind: input, shape index: {}]
  %s3 = inlined_call_operand.vmem [shape: f32[40,1], index: 3, kind: input, shape index: {}]
  %s4 = inlined_call_operand.vmem [shape: bf16[8,216], index: 4, kind: input, shape index: {}]
  %s5 = inlined_call_operand.vmem [shape: f32[8,1], index: 5, kind: input, shape index: {}]
  %s6 = inlined_call_operand.vmem [shape: f32[8,1], index: 6, kind: input, shape index: {}]
  %s7 = inlined_call_operand.vmem [shape: bf16[32,8], index: 7, kind: input, shape index: {}]
  %s8 = inlined_call_operand.vmem [shape: f32[32,1], index: 8, kind: input, shape index: {}]
  %s9 = inlined_call_operand.vmem [shape: f32[32,1], index: 9, kind: input, shape index: {}]
  %s10 = inlined_call_operand.vmem [shape: f32[27,512], index: 10, kind: input, shape index: {}]
  %s11 = inlined_call_operand.vmem [shape: f32[2,32,512], index: 11, kind: output, shape index: {}]
  %s12 = sld [smem:[#allocation0]]
  $region77: #{bottleneck_forward.1} parent=0
    _
  %s14 = ssub.s32 1, %s12
  %s15 = scalar_select 0, %s14, %s12
  loop: start=0, step=1, limit=4
  $region2: #{bottleneck_forward.1} parent=0 // loop_pre_header
    _
  $region3: #{bottleneck_forward.1} parent=0 // loop_header
    %s17 = sphi 0, %s21
    %p18 = scmp.ge.s32.totalorder %s17, 4
    %s27 = sphi 0, %s29
    %s30 = sphi 0, %s27
    %s31 = sphi 0, %s30
    %s47 = sphi 0, %s31
    %s51 = sphi 0, %s51
    %s53 = sphi 0, %s51
    %s54 = sphi 0, %s53
    %s68 = sphi 0, %s54
    %s72 = sphi 0, %s72
    %s74 = sphi 0, %s72
    %s75 = sphi 0, %s74
    %s89 = sphi 0, %s75
    %s93 = sphi 0, %s93
    %s95 = sphi 0, %s93
    %s96 = sphi 0, %s95
    %s110 = sphi 0, %s96
    %s114 = sphi 0, %s114
    %s116 = sphi 0, %s114
    %s117 = sphi 0, %s116
    %s131 = sphi 0, %s117
    %s135 = sphi 0, %s135
    %s137 = sphi 0, %s135
    %s138 = sphi 0, %s137
    %s152 = sphi 0, %s138
    %s156 = sphi 0, %s156
    %s158 = sphi 0, %s156
    %s159 = sphi 0, %s158
    %s173 = sphi 0, %s159
    %s177 = sphi 0, %s177
    %s179 = sphi 0, %s177
    %s180 = sphi 0, %s179
    %s194 = sphi 0, %s180
    %s198 = sphi 0, %s198
    %s200 = sphi 0, %s198
    %s201 = sphi 0, %s200
    %s215 = sphi 0, %s201
    %s219 = sphi 0, %s219
    %s221 = sphi 0, %s219
    %s222 = sphi 0, %s221
    %s236 = sphi 0, %s222
    %s240 = sphi 0, %s240
    %s242 = sphi 0, %s240
    %s243 = sphi 0, %s242
    %s257 = sphi 0, %s243
    %s263 = sphi 0, %s265
    %s266 = sphi 0, %s263
    %s267 = sphi 0, %s266
    %s283 = sphi 0, %s267
  $region4: #{bottleneck_forward.1} parent=0 // loop_header_branch
    %20 = sbr.rel (%p18) target = $region8
  $region5: #{bottleneck_forward.1} parent=0 // loop_body
    %s22 = ssub.s32 %s17, 1
    %s23 = ssub.s32 %s17, 2
    %s24 = sadd.s32 %s17, 1
    %s25 = ssub.s32 %s17, %s24
    %p26 = scmp.eq.s32.totalorder %s25, 0
    %s28 = sadd.s32 %s27, 1
    %s29 = scalar_select %p26, %s27, %s28
    %p32 = pneg %p26
    %p33 = scmp.eq.s32.totalorder %s17, 1
    %p34 = por %p32, %p33
    %p35 = scmp.ne.s32.totalorder %s27, %s30
    %p36 = scmp.eq.s32.totalorder %s17, 0
    %p37 = por %p35, %p36
    %p38 = scmp.ne.s32.totalorder %s27, %s30
    %p39 = scmp.eq.s32.totalorder %s22, 1
    %p40 = por %p38, %p39
    %p41 = scmp.ne.s32.totalorder %s30, %s31
    %p42 = scmp.eq.s32.totalorder %s22, 0
    %p43 = por %p41, %p42
    %p44 = scmp.ne.s32.totalorder %s30, %s31
    %p45 = scmp.eq.s32.totalorder %s23, 1
    %p46 = por %p44, %p45
    %p48 = scmp.ne.s32.totalorder %s31, %s47
    %p49 = scmp.eq.s32.totalorder %s23, 0
    %p50 = por %p48, %p49
    %s52 = sadd.s32 %s51, 1
    %p55 = scmp.eq.s32.totalorder %s17, 1
    %p56 = scmp.ne.s32.totalorder %s51, %s53
    %p57 = scmp.eq.s32.totalorder %s17, 0
    %p58 = por %p56, %p57
    %p59 = scmp.ne.s32.totalorder %s51, %s53
    %p60 = scmp.eq.s32.totalorder %s22, 1
    %p61 = por %p59, %p60
    %p62 = scmp.ne.s32.totalorder %s53, %s54
    %p63 = scmp.eq.s32.totalorder %s22, 0
    %p64 = por %p62, %p63
    %p65 = scmp.ne.s32.totalorder %s53, %s54
    %p66 = scmp.eq.s32.totalorder %s23, 1
    %p67 = por %p65, %p66
    %p69 = scmp.ne.s32.totalorder %s54, %s68
    %p70 = scmp.eq.s32.totalorder %s23, 0
    %p71 = por %p69, %p70
    %s73 = sadd.s32 %s72, 1
    %p76 = scmp.eq.s32.totalorder %s17, 1
    %p77 = scmp.ne.s32.totalorder %s72, %s74
    %p78 = scmp.eq.s32.totalorder %s17, 0
    %p79 = por %p77, %p78
    %p80 = scmp.ne.s32.totalorder %s72, %s74
    %p81 = scmp.eq.s32.totalorder %s22, 1
    %p82 = por %p80, %p81
    %p83 = scmp.ne.s32.totalorder %s74, %s75
    %p84 = scmp.eq.s32.totalorder %s22, 0
    %p85 = por %p83, %p84
    %p86 = scmp.ne.s32.totalorder %s74, %s75
    %p87 = scmp.eq.s32.totalorder %s23, 1
    %p88 = por %p86, %p87
    %p90 = scmp.ne.s32.totalorder %s75, %s89
    %p91 = scmp.eq.s32.totalorder %s23, 0
    %p92 = por %p90, %p91
    %s94 = sadd.s32 %s93, 1
    %p97 = scmp.eq.s32.totalorder %s17, 1
    %p98 = scmp.ne.s32.totalorder %s93, %s95
    %p99 = scmp.eq.s32.totalorder %s17, 0
    %p100 = por %p98, %p99
    %p101 = scmp.ne.s32.totalorder %s93, %s95
    %p102 = scmp.eq.s32.totalorder %s22, 1
    %p103 = por %p101, %p102
    %p104 = scmp.ne.s32.totalorder %s95, %s96
    %p105 = scmp.eq.s32.totalorder %s22, 0
    %p106 = por %p104, %p105
    %p107 = scmp.ne.s32.totalorder %s95, %s96
    %p108 = scmp.eq.s32.totalorder %s23, 1
    %p109 = por %p107, %p108
    %p111 = scmp.ne.s32.totalorder %s96, %s110
    %p112 = scmp.eq.s32.totalorder %s23, 0
    %p113 = por %p111, %p112
    %s115 = sadd.s32 %s114, 1
    %p118 = scmp.eq.s32.totalorder %s17, 1
    %p119 = scmp.ne.s32.totalorder %s114, %s116
    %p120 = scmp.eq.s32.totalorder %s17, 0
    %p121 = por %p119, %p120
    %p122 = scmp.ne.s32.totalorder %s114, %s116
    %p123 = scmp.eq.s32.totalorder %s22, 1
    %p124 = por %p122, %p123
    %p125 = scmp.ne.s32.totalorder %s116, %s117
    %p126 = scmp.eq.s32.totalorder %s22, 0
    %p127 = por %p125, %p126
    %p128 = scmp.ne.s32.totalorder %s116, %s117
    %p129 = scmp.eq.s32.totalorder %s23, 1
    %p130 = por %p128, %p129
    %p132 = scmp.ne.s32.totalorder %s117, %s131
    %p133 = scmp.eq.s32.totalorder %s23, 0
    %p134 = por %p132, %p133
    %s136 = sadd.s32 %s135, 1
    %p139 = scmp.eq.s32.totalorder %s17, 1
    %p140 = scmp.ne.s32.totalorder %s135, %s137
    %p141 = scmp.eq.s32.totalorder %s17, 0
    %p142 = por %p140, %p141
    %p143 = scmp.ne.s32.totalorder %s135, %s137
    %p144 = scmp.eq.s32.totalorder %s22, 1
    %p145 = por %p143, %p144
    %p146 = scmp.ne.s32.totalorder %s137, %s138
    %p147 = scmp.eq.s32.totalorder %s22, 0
    %p148 = por %p146, %p147
    %p149 = scmp.ne.s32.totalorder %s137, %s138
    %p150 = scmp.eq.s32.totalorder %s23, 1
    %p151 = por %p149, %p150
    %p153 = scmp.ne.s32.totalorder %s138, %s152
    %p154 = scmp.eq.s32.totalorder %s23, 0
    %p155 = por %p153, %p154
    %s157 = sadd.s32 %s156, 1
    %p160 = scmp.eq.s32.totalorder %s17, 1
    %p161 = scmp.ne.s32.totalorder %s156, %s158
    %p162 = scmp.eq.s32.totalorder %s17, 0
    %p163 = por %p161, %p162
    %p164 = scmp.ne.s32.totalorder %s156, %s158
    %p165 = scmp.eq.s32.totalorder %s22, 1
    %p166 = por %p164, %p165
    %p167 = scmp.ne.s32.totalorder %s158, %s159
    %p168 = scmp.eq.s32.totalorder %s22, 0
    %p169 = por %p167, %p168
    %p170 = scmp.ne.s32.totalorder %s158, %s159
    %p171 = scmp.eq.s32.totalorder %s23, 1
    %p172 = por %p170, %p171
    %p174 = scmp.ne.s32.totalorder %s159, %s173
    %p175 = scmp.eq.s32.totalorder %s23, 0
    %p176 = por %p174, %p175
    %s178 = sadd.s32 %s177, 1
    %p181 = scmp.eq.s32.totalorder %s17, 1
    %p182 = scmp.ne.s32.totalorder %s177, %s179
    %p183 = scmp.eq.s32.totalorder %s17, 0
    %p184 = por %p182, %p183
    %p185 = scmp.ne.s32.totalorder %s177, %s179
    %p186 = scmp.eq.s32.totalorder %s22, 1
    %p187 = por %p185, %p186
    %p188 = scmp.ne.s32.totalorder %s179, %s180
    %p189 = scmp.eq.s32.totalorder %s22, 0
    %p190 = por %p188, %p189
    %p191 = scmp.ne.s32.totalorder %s179, %s180
    %p192 = scmp.eq.s32.totalorder %s23, 1
    %p193 = por %p191, %p192
    %p195 = scmp.ne.s32.totalorder %s180, %s194
    %p196 = scmp.eq.s32.totalorder %s23, 0
    %p197 = por %p195, %p196
    %s199 = sadd.s32 %s198, 1
    %p202 = scmp.eq.s32.totalorder %s17, 1
    %p203 = scmp.ne.s32.totalorder %s198, %s200
    %p204 = scmp.eq.s32.totalorder %s17, 0
    %p205 = por %p203, %p204
    %p206 = scmp.ne.s32.totalorder %s198, %s200
    %p207 = scmp.eq.s32.totalorder %s22, 1
    %p208 = por %p206, %p207
    %p209 = scmp.ne.s32.totalorder %s200, %s201
    %p210 = scmp.eq.s32.totalorder %s22, 0
    %p211 = por %p209, %p210
    %p212 = scmp.ne.s32.totalorder %s200, %s201
    %p213 = scmp.eq.s32.totalorder %s23, 1
    %p214 = por %p212, %p213
    %p216 = scmp.ne.s32.totalorder %s201, %s215
    %p217 = scmp.eq.s32.totalorder %s23, 0
    %p218 = por %p216, %p217
    %s220 = sadd.s32 %s219, 1
    %p223 = scmp.eq.s32.totalorder %s17, 1
    %p224 = scmp.ne.s32.totalorder %s219, %s221
    %p225 = scmp.eq.s32.totalorder %s17, 0
    %p226 = por %p224, %p225
    %p227 = scmp.ne.s32.totalorder %s219, %s221
    %p228 = scmp.eq.s32.totalorder %s22, 1
    %p229 = por %p227, %p228
    %p230 = scmp.ne.s32.totalorder %s221, %s222
    %p231 = scmp.eq.s32.totalorder %s22, 0
    %p232 = por %p230, %p231
    %p233 = scmp.ne.s32.totalorder %s221, %s222
    %p234 = scmp.eq.s32.totalorder %s23, 1
    %p235 = por %p233, %p234
    %p237 = scmp.ne.s32.totalorder %s222, %s236
    %p238 = scmp.eq.s32.totalorder %s23, 0
    %p239 = por %p237, %p238
    %s241 = sadd.s32 %s240, 1
    %p244 = scmp.eq.s32.totalorder %s17, 1
    %p245 = scmp.ne.s32.totalorder %s240, %s242
    %p246 = scmp.eq.s32.totalorder %s17, 0
    %p247 = por %p245, %p246
    %p248 = scmp.ne.s32.totalorder %s240, %s242
    %p249 = scmp.eq.s32.totalorder %s22, 1
    %p250 = por %p248, %p249
    %p251 = scmp.ne.s32.totalorder %s242, %s243
    %p252 = scmp.eq.s32.totalorder %s22, 0
    %p253 = por %p251, %p252
    %p254 = scmp.ne.s32.totalorder %s242, %s243
    %p255 = scmp.eq.s32.totalorder %s23, 1
    %p256 = por %p254, %p255
    %p258 = scmp.ne.s32.totalorder %s243, %s257
    %p259 = scmp.eq.s32.totalorder %s23, 0
    %p260 = por %p258, %p259
    %s261 = ssub.s32 %s17, %s24
    %p262 = scmp.eq.s32.totalorder %s261, 0
    %s264 = sadd.s32 %s263, 1
    %s265 = scalar_select %p262, %s263, %s264
    %p268 = pneg %p262
    %p269 = scmp.eq.s32.totalorder %s17, 1
    %p270 = por %p268, %p269
    %p271 = scmp.ne.s32.totalorder %s263, %s266
    %p272 = scmp.eq.s32.totalorder %s17, 0
    %p273 = por %p271, %p272
    %p274 = scmp.ne.s32.totalorder %s263, %s266
    %p275 = scmp.eq.s32.totalorder %s22, 1
    %p276 = por %p274, %p275
    %p277 = scmp.ne.s32.totalorder %s266, %s267
    %p278 = scmp.eq.s32.totalorder %s22, 0
    %p279 = por %p277, %p278
    %p280 = scmp.ne.s32.totalorder %s266, %s267
    %p281 = scmp.eq.s32.totalorder %s23, 1
    %p282 = por %p280, %p281
    %p284 = scmp.ne.s32.totalorder %s267, %s283
    %p285 = scmp.eq.s32.totalorder %s23, 0
    %p286 = por %p284, %p285
    %p287 = scmp.le.s32.totalorder 1, %s17
    %p288 = scmp.lt.s32.totalorder %s17, 3
    %p289 = pnand %p287, %p288
    %p290 = pneg %p289
    // Predicated region
    $region9: #{bottleneck_forward.1} parent=5 // pred_check
      _
    $region10: #{bottleneck_forward.1} parent=5 // pred_check_branch
      %292 = sbr.rel (%p289) target = $region12
    $region11: #{bottleneck_forward.1} parent=5 // pred_region
      %s293 = ssub.s32 %s17, 1
      // Predicated region
      $region13: #{bottleneck_forward.1} parent=11 // pred_check
        %p294 = pneg %p64
      $region14: #{bottleneck_forward.1} parent=11 // pred_check_branch
        %296 = sbr.rel (%p294) target = $region16
      $region15: #{bottleneck_forward.1} parent=11 // pred_region
        _
      $region16: #{bottleneck_forward.1} parent=11 // pred_fallthru
        _
      // Predicated region
      $region17: #{bottleneck_forward.1} parent=11 // pred_check
        %p297 = pneg %p85
      $region18: #{bottleneck_forward.1} parent=11 // pred_check_branch
        %299 = sbr.rel (%p297) target = $region20
      $region19: #{bottleneck_forward.1} parent=11 // pred_region
        _
      $region20: #{bottleneck_forward.1} parent=11 // pred_fallthru
        _
      // Predicated region
      $region21: #{bottleneck_forward.1} parent=11 // pred_check
        %p300 = pneg %p106
      $region22: #{bottleneck_forward.1} parent=11 // pred_check_branch
        %302 = sbr.rel (%p300) target = $region24
      $region23: #{bottleneck_forward.1} parent=11 // pred_region
        _
      $region24: #{bottleneck_forward.1} parent=11 // pred_fallthru
        _
      // Predicated region
      $region25: #{bottleneck_forward.1} parent=11 // pred_check
        %p303 = pneg %p127
      $region26: #{bottleneck_forward.1} parent=11 // pred_check_branch
        %305 = sbr.rel (%p303) target = $region28
      $region27: #{bottleneck_forward.1} parent=11 // pred_region
        _
      $region28: #{bottleneck_forward.1} parent=11 // pred_fallthru
        _
      // Predicated region
      $region29: #{bottleneck_forward.1} parent=11 // pred_check
        %p306 = pneg %p148
      $region30: #{bottleneck_forward.1} parent=11 // pred_check_branch
        %308 = sbr.rel (%p306) target = $region32
      $region31: #{bottleneck_forward.1} parent=11 // pred_region
        _
      $region32: #{bottleneck_forward.1} parent=11 // pred_fallthru
        _
      // Predicated region
      $region33: #{bottleneck_forward.1} parent=11 // pred_check
        %p309 = pneg %p169
      $region34: #{bottleneck_forward.1} parent=11 // pred_check_branch
        %311 = sbr.rel (%p309) target = $region36
      $region35: #{bottleneck_forward.1} parent=11 // pred_region
        _
      $region36: #{bottleneck_forward.1} parent=11 // pred_fallthru
        _
      // Predicated region
      $region37: #{bottleneck_forward.1} parent=11 // pred_check
        %p312 = pneg %p190
      $region38: #{bottleneck_forward.1} parent=11 // pred_check_branch
        %314 = sbr.rel (%p312) target = $region40
      $region39: #{bottleneck_forward.1} parent=11 // pred_region
        _
      $region40: #{bottleneck_forward.1} parent=11 // pred_fallthru
        _
      // Predicated region
      $region41: #{bottleneck_forward.1} parent=11 // pred_check
        %p315 = pneg %p211
      $region42: #{bottleneck_forward.1} parent=11 // pred_check_branch
        %317 = sbr.rel (%p315) target = $region44
      $region43: #{bottleneck_forward.1} parent=11 // pred_region
        _
      $region44: #{bottleneck_forward.1} parent=11 // pred_fallthru
        _
      // Predicated region
      $region45: #{bottleneck_forward.1} parent=11 // pred_check
        %p318 = pneg %p232
      $region46: #{bottleneck_forward.1} parent=11 // pred_check_branch
        %320 = sbr.rel (%p318) target = $region48
      $region47: #{bottleneck_forward.1} parent=11 // pred_region
        _
      $region48: #{bottleneck_forward.1} parent=11 // pred_fallthru
        _
      // Predicated region
      $region49: #{bottleneck_forward.1} parent=11 // pred_check
        %p321 = pneg %p253
      $region50: #{bottleneck_forward.1} parent=11 // pred_check_branch
        %323 = sbr.rel (%p321) target = $region52
      $region51: #{bottleneck_forward.1} parent=11 // pred_region
        _
      $region52: #{bottleneck_forward.1} parent=11 // pred_fallthru
        _
    $region12: #{bottleneck_forward.1} parent=5 // pred_fallthru
      _
    %p324 = scmp.lt.s32.totalorder %s17, 2
    // Predicated region
    $region53: #{bottleneck_forward.1} parent=5 // pred_check
      %p325 = pneg %p324
    $region54: #{bottleneck_forward.1} parent=5 // pred_check_branch
      %327 = sbr.rel (%p325) target = $region56
    $region55: #{bottleneck_forward.1} parent=5 // pred_region
      // Predicated region
      $region57: #{bottleneck_forward.1} parent=55 // pred_check
        %p328 = pneg %p37
      $region58: #{bottleneck_forward.1} parent=55 // pred_check_branch
        %330 = sbr.rel (%p328) target = $region60
      $region59: #{bottleneck_forward.1} parent=55 // pred_region
        %p331 = scmp.lt.s32.totalorder %s17, 1
        %s332 = scalar_select %p331, %s17, 1
        %s333 = smul.addr %s332, 4
        %s334 = smul.addr %s333, 8
        %s335 = scalar_lea.vmem %s0, %s334
      $region60: #{bottleneck_forward.1} parent=55 // pred_fallthru
        _
    $region56: #{bottleneck_forward.1} parent=5 // pred_fallthru
      _
    %p336 = scmp.le.s32.totalorder 1, %s17
    %p337 = scmp.lt.s32.totalorder %s17, 3
    %p338 = pnand %p336, %p337
    %p339 = pneg %p338
    // Predicated region
    $region61: #{bottleneck_forward.1} parent=5 // pred_check
      _
    $region62: #{bottleneck_forward.1} parent=5 // pred_check_branch
      %341 = sbr.rel (%p338) target = $region64
    $region63: #{bottleneck_forward.1} parent=5 // pred_region
      %s342 = ssub.s32 %s17, 1
      %p343 = scmp.lt.s32.totalorder %s22, 1
      %s344 = scalar_select %p343, %s22, 1
      %s345 = smul.addr %s344, 4
      %s346 = smul.addr %s345, 8
      %s347 = scalar_lea.vmem %s0, %s346
      %p348 = pneg %p43
      %p349 = pneg %p40
      %p350 = pneg %p64
      %p351 = pneg %p61
      %p352 = pneg %p85
      %p353 = pneg %p82
      %p354 = pneg %p106
      %p355 = pneg %p103
      %p356 = pneg %p127
      %p357 = pneg %p124
      %p358 = pneg %p148
      %p359 = pneg %p145
      %p360 = pneg %p169
      %p361 = pneg %p166
      %p362 = pneg %p190
      %p363 = pneg %p187
      %p364 = pneg %p211
      %p365 = pneg %p208
      %p366 = pneg %p232
      %p367 = pneg %p229
      %p368 = pneg %p253
      %p369 = pneg %p250
      %p370 = pneg %p279
      %p371 = pneg %p276
      %p372 = scmp.lt.s32.totalorder %s22, 1
      %s373 = scalar_select %p372, %s22, 1
      %s374 = smul.addr %s373, 16
      %s375 = smul.addr %s374, 8
      %s376 = scalar_lea.vmem %s11, %s375
      %p377 = scmp.lt.s32.totalorder %s22, 1
      %s378 = scalar_select %p377, %s22, 1
      %s379 = smul.addr %s378, 4
      %s380 = smul.addr %s379, 8
      %s381 = scalar_lea.vmem %s0, %s380
      %p382 = scmp.lt.s32.totalorder %s22, 1
      %s383 = scalar_select %p382, %s22, 1
      %s384 = smul.addr %s383, 16
      %s385 = smul.addr %s384, 8
      %s386 = scalar_lea.vmem %s11, %s385
      %v388 = vld [vmem:[%s381] sm:$0xff]
      %v389 = vld [vmem:[%s381 + $0x8] sm:$0xff]
      %v390 = vld [vmem:[%s381 + $0x10] sm:$0xff]
      %v391 = vld [vmem:[%s381 + $0x18] sm:$0xff]
      %v392 = vpack.c.bf16 %v388, %v388
      %v393 = vpack.c.bf16 %v389, %v389
      %v394 = vpack.c.bf16 %v390, %v390
      %v395 = vpack.c.bf16 %v391, %v391
      %v396 = vld [vmem:[%s1] sm:$0xf]
      %v397 = vld [vmem:[%s1 + $0x4] sm:$0xf]
      %v398 = vld [vmem:[%s1 + $0x8] sm:$0xf]
      %v399 = vld [vmem:[%s1 + $0xc] sm:$0xf]
      %v400 = vld [vmem:[%s1 + $0x10] sm:$0xf]
      %v406 = vunpack.c.l.b16 %v396
      %v407 = vunpack.c.l.b16 %v397
      %v408 = vunpack.c.l.b16 %v398
      %v409 = vunpack.c.l.b16 %v399
      %v410 = vunpack.c.l.b16 %v400
      %v411 = vpack.c.b16 %v407, %v406
      %v412 = vpack.c.b16 %v409, %v408
      %v413 = vpack.c.b16 %v410, %v410
      %vm414 = vcmask 64512
      %v416 = vsel %vm414, %v411, 0
      %v419 = vsel %vm414, %v412, 0
      %v422 = vsel %vm414, %v413, 0
      %vm424 = vcmask 1043456
      %v426 = vsel %vm424, %v392, 0
      %v429 = vsel %vm424, %v393, 0
      %v432 = vsel %vm424, %v394, 0
      %v435 = vsel %vm424, %v395, 0
      %437 = vmatprep.subr.bf16.mxu0 %v429
      %438 = vmatpush1.bf16.msra.mxu0 %v426
      %439 = vmatprep.subr.bf16.mxu0 0
      %440 = vmatpush1.bf16.msra.mxu0 0
      %441 = vmatprep.subr.bf16.mxu0 0
      %442 = vmatpush1.bf16.msra.mxu0 0
      %443 = vmatprep.subr.bf16.mxu0 0
      %444 = vmatpush1.bf16.msra.mxu0 0
      %445 = vmatprep.subr.bf16.mxu0 0
      %446 = vmatpush1.bf16.msra.mxu0 0
      %447 = vmatprep.subr.bf16.mxu0 0
      %448 = vmatpush1.bf16.msra.mxu0 0
      %449 = vmatprep.subr.bf16.mxu0 0
      %450 = vmatpush1.bf16.msra.mxu0 0
      %451 = vmatprep.subr.bf16.mxu0 0
      %452 = vmatpush1.bf16.msra.mxu0 0
      %453 = vmatprep.subr.bf16.mxu0 0
      %454 = vmatpush1.bf16.msra.mxu0 0
      %455 = vmatprep.subr.bf16.mxu0 0
      %456 = vmatpush1.bf16.msra.mxu0 0
      %457 = vmatprep.subr.bf16.mxu0 0
      %458 = vmatpush1.bf16.msra.mxu0 0
      %459 = vmatprep.subr.bf16.mxu0 0
      %460 = vmatpush1.bf16.msra.mxu0 0
      %461 = vmatprep.subr.bf16.mxu0 0
      %462 = vmatpush1.bf16.msra.mxu0 0
      %463 = vmatprep.subr.bf16.mxu0 0
      %464 = vmatpush1.bf16.msra.mxu0 0
      %465 = vmatprep.subr.bf16.mxu0 0
      %466 = vmatpush1.bf16.msra.mxu0 0
      %467 = vmatprep.subr.bf16.mxu0 0
      %468 = vmatpush1.bf16.msra.mxu0 0
      %469 = vmatprep.mubr.bf16.mxu0 0
      %470 = vmatmul.mubr.bf16.gmra.mrb[0].mxu0 %v416
      %v471 = vpop.f32.mrb[0].mxu0
      %v472 = vadd.f32 0.0, %v471
      %v473 = vpop.f32.mrb[0].mxu0
      %v474 = vadd.f32 0.0, %v473
      %v475 = vpop.f32.mrb[0].mxu0
      %v476 = vadd.f32 0.0, %v475
      %v477 = vpop.f32.mrb[0].mxu0
      %v478 = vadd.f32 0.0, %v477
      %479 = vmatprep.mubr.bf16.mxu0 0
      %480 = vmatmul.mubr.bf16.gmra.mrb[0].mxu0 %v419
      %v481 = vpop.f32.mrb[0].mxu0
      %v482 = vadd.f32 0.0, %v481
      %v483 = vpop.f32.mrb[0].mxu0
      %v484 = vadd.f32 0.0, %v483
      %v485 = vpop.f32.mrb[0].mxu0
      %v486 = vadd.f32 0.0, %v485
      %v487 = vpop.f32.mrb[0].mxu0
      %v488 = vadd.f32 0.0, %v487
      %489 = vmatprep.mubr.bf16.mxu0 0
      %490 = vmatmul.mubr.bf16.gmra.mrb[0].mxu0 %v422
      %v491 = vpop.f32.mrb[0].mxu0
      %v492 = vadd.f32 0.0, %v491
      %v493 = vpop.f32.mrb[0].mxu0
      %v494 = vadd.f32 0.0, %v493
      %v495 = vpop.f32.mrb[0].mxu0
      %v496 = vpop.f32.mrb[0].mxu0
      %497 = vdwg.mxu0
      %498 = vmatprep.subr.bf16.mxu0 %v435
      %499 = vmatpush1.bf16.msra.mxu0 %v432
      %500 = vmatprep.subr.bf16.mxu0 0
      %501 = vmatpush1.bf16.msra.mxu0 0
      %502 = vmatprep.subr.bf16.mxu0 0
      %503 = vmatpush1.bf16.msra.mxu0 0
      %504 = vmatprep.subr.bf16.mxu0 0
      %505 = vmatpush1.bf16.msra.mxu0 0
      %506 = vmatprep.subr.bf16.mxu0 0
      %507 = vmatpush1.bf16.msra.mxu0 0
      %508 = vmatprep.subr.bf16.mxu0 0
      %509 = vmatpush1.bf16.msra.mxu0 0
      %510 = vmatprep.subr.bf16.mxu0 0
      %511 = vmatpush1.bf16.msra.mxu0 0
      %512 = vmatprep.subr.bf16.mxu0 0
      %513 = vmatpush1.bf16.msra.mxu0 0
      %514 = vmatprep.subr.bf16.mxu0 0
      %515 = vmatpush1.bf16.msra.mxu0 0
      %516 = vmatprep.subr.bf16.mxu0 0
      %517 = vmatpush1.bf16.msra.mxu0 0
      %518 = vmatprep.subr.bf16.mxu0 0
      %519 = vmatpush1.bf16.msra.mxu0 0
      %520 = vmatprep.subr.bf16.mxu0 0
      %521 = vmatpush1.bf16.msra.mxu0 0
      %522 = vmatprep.subr.bf16.mxu0 0
      %523 = vmatpush1.bf16.msra.mxu0 0
      %524 = vmatprep.subr.bf16.mxu0 0
      %525 = vmatpush1.bf16.msra.mxu0 0
      %526 = vmatprep.subr.bf16.mxu0 0
      %527 = vmatpush1.bf16.msra.mxu0 0
      %528 = vmatprep.subr.bf16.mxu0 0
      %529 = vmatpush1.bf16.msra.mxu0 0
      %530 = vmatprep.mubr.bf16.mxu0 0
      %531 = vmatmul.mubr.bf16.gmra.mrb[0].mxu0 %v416
      %v532 = vpop.f32.mrb[0].mxu0
      %v533 = vadd.f32 0.0, %v532
      %v534 = vpop.f32.mrb[0].mxu0
      %v535 = vadd.f32 0.0, %v534
      %v536 = vpop.f32.mrb[0].mxu0
      %v537 = vadd.f32 0.0, %v536
      %v538 = vpop.f32.mrb[0].mxu0
      %v539 = vadd.f32 0.0, %v538
      %540 = vmatprep.mubr.bf16.mxu0 0
      %541 = vmatmul.mubr.bf16.gmra.mrb[0].mxu0 %v419
      %v542 = vpop.f32.mrb[0].mxu0
      %v543 = vadd.f32 0.0, %v542
      %v544 = vpop.f32.mrb[0].mxu0
      %v545 = vadd.f32 0.0, %v544
      %v546 = vpop.f32.mrb[0].mxu0
      %v547 = vadd.f32 0.0, %v546
      %v548 = vpop.f32.mrb[0].mxu0
      %v549 = vadd.f32 0.0, %v548
      %550 = vmatprep.mubr.bf16.mxu0 0
      %551 = vmatmul.mubr.bf16.gmra.mrb[0].mxu0 %v422
      %v552 = vpop.f32.mrb[0].mxu0
      %v553 = vadd.f32 0.0, %v552
      %v554 = vpop.f32.mrb[0].mxu0
      %v555 = vadd.f32 0.0, %v554
      %v556 = vpop.f32.mrb[0].mxu0
      %v557 = vpop.f32.mrb[0].mxu0
      %558 = vdwg.mxu0
      %v559 = vld [vmem:[%s2] sm:$0xff]
      %v560 = vld [vmem:[%s2 + $0x8] sm:$0xff]
      %v561 = vld [vmem:[%s2 + $0x10] sm:$0xff]
      %v562 = vld [vmem:[%s2 + $0x18] sm:$0xff]
      %v563 = vld [vmem:[%s2 + $0x20] sm:$0xff]
      %565 = vset.pattern.permute.xlu0 0
      %566 = vperm.xlu0 %565, %v559
      %v567 = vpop.permute.xlu0 %566
      %570 = vset.pattern.permute.xlu0 0
      %571 = vperm.xlu0 %570, %v560
      %v572 = vpop.permute.xlu0 %571
      %575 = vset.pattern.permute.xlu0 0
      %576 = vperm.xlu0 %575, %v561
      %v577 = vpop.permute.xlu0 %576
      %580 = vset.pattern.permute.xlu0 0
      %581 = vperm.xlu0 %580, %v562
      %v582 = vpop.permute.xlu0 %581
      %585 = vset.pattern.permute.xlu0 0
      %586 = vperm.xlu0 %585, %v563
      %v587 = vpop.permute.xlu0 %586
      %v589 = vmul.f32 %v472, %v567
      %v590 = vmul.f32 %v474, %v567
      %v591 = vmul.f32 %v533, %v567
      %v592 = vmul.f32 %v535, %v567
      %v593 = vmul.f32 %v476, %v572
      %v594 = vmul.f32 %v478, %v572
      %v595 = vmul.f32 %v537, %v572
      %v596 = vmul.f32 %v539, %v572
      %v597 = vmul.f32 %v482, %v577
      %v598 = vmul.f32 %v484, %v577
      %v599 = vmul.f32 %v543, %v577
      %v600 = vmul.f32 %v545, %v577
      %v601 = vmul.f32 %v486, %v582
      %v602 = vmul.f32 %v488, %v582
      %v603 = vmul.f32 %v547, %v582
      %v604 = vmul.f32 %v549, %v582
      %v605 = vmul.f32 %v492, %v587
      %v606 = vmul.f32 %v494, %v587
      %v607 = vmul.f32 %v553, %v587
      %v608 = vmul.f32 %v555, %v587
      %v609 = vld [vmem:[%s3] sm:$0xff]
      %v610 = vld [vmem:[%s3 + $0x8] sm:$0xff]
      %v611 = vld [vmem:[%s3 + $0x10] sm:$0xff]
      %v612 = vld [vmem:[%s3 + $0x18] sm:$0xff]
      %v613 = vld [vmem:[%s3 + $0x20] sm:$0xff]
      %615 = vset.pattern.permute.xlu0 0
      %616 = vperm.xlu0 %615, %v609
      %v617 = vpop.permute.xlu0 %616
      %620 = vset.pattern.permute.xlu0 0
      %621 = vperm.xlu0 %620, %v610
      %v622 = vpop.permute.xlu0 %621
      %625 = vset.pattern.permute.xlu0 0
      %626 = vperm.xlu0 %625, %v611
      %v627 = vpop.permute.xlu0 %626
      %630 = vset.pattern.permute.xlu0 0
      %631 = vperm.xlu0 %630, %v612
      %v632 = vpop.permute.xlu0 %631
      %635 = vset.pattern.permute.xlu0 0
      %636 = vperm.xlu0 %635, %v613
      %v637 = vpop.permute.xlu0 %636
      %v639 = vadd.f32 %v589, %v617
      %v640 = vadd.f32 %v590, %v617
      %v641 = vadd.f32 %v591, %v617
      %v642 = vadd.f32 %v592, %v617
      %v643 = vadd.f32 %v593, %v622
      %v644 = vadd.f32 %v594, %v622
      %v645 = vadd.f32 %v595, %v622
      %v646 = vadd.f32 %v596, %v622
      %v647 = vadd.f32 %v597, %v627
      %v648 = vadd.f32 %v598, %v627
      %v649 = vadd.f32 %v599, %v627
      %v650 = vadd.f32 %v600, %v627
      %v651 = vadd.f32 %v601, %v632
      %v652 = vadd.f32 %v602, %v632
      %v653 = vadd.f32 %v603, %v632
      %v654 = vadd.f32 %v604, %v632
      %v655 = vadd.f32 %v605, %v637
      %v656 = vadd.f32 %v606, %v637
      %v657 = vadd.f32 %v607, %v637
      %v658 = vadd.f32 %v608, %v637
      %v659 = vmax.f32 %v639, 0.0
      %v660 = vmax.f32 %v640, 0.0
      %v661 = vmax.f32 %v641, 0.0
      %v662 = vmax.f32 %v642, 0.0
      %663 = vst [vmem:[%s386] sm:$0xff] %v643
      %664 = vst [vmem:[%s386 + $0x8] sm:$0xff] %v644
      %665 = vst [vmem:[%s386 + $0x10] sm:$0xff] %v645
      %666 = vst [vmem:[%s386 + $0x18] sm:$0xff] %v646
      %667 = vst [vmem:[%s386 + $0x20] sm:$0xff] %v647
      %668 = vst [vmem:[%s386 + $0x28] sm:$0xff] %v648
      %669 = vst [vmem:[%s386 + $0x30] sm:$0xff] %v649
      %670 = vst [vmem:[%s386 + $0x38] sm:$0xff] %v650
      %671 = vst [vmem:[%s386 + $0x40] sm:$0xff] %v651
      %672 = vst [vmem:[%s386 + $0x48] sm:$0xff] %v652
      %673 = vst [vmem:[%s386 + $0x50] sm:$0xff] %v653
      %674 = vst [vmem:[%s386 + $0x58] sm:$0xff] %v654
      %675 = vst [vmem:[%s386 + $0x60] sm:$0xff] %v655
      %676 = vst [vmem:[%s386 + $0x68] sm:$0xff] %v656
      %677 = vst [vmem:[%s386 + $0x70] sm:$0xff] %v657
      %678 = vst [vmem:[%s386 + $0x78] sm:$0xff] %v658
      %679 = vrot.lane.b32.xlu0 %v659, 73
      %v680 = vpop.permute.xlu0 %679
      %681 = vrot.lane.b32.xlu0 %v660, 73
      %v682 = vpop.permute.xlu0 %681
      %683 = vrot.lane.b32.xlu0 %v661, 73
      %v684 = vpop.permute.xlu0 %683
      %685 = vrot.lane.b32.xlu0 %v662, 73
      %v686 = vpop.permute.xlu0 %685
      %v687 = vlaneseq
      %v688 = vand.u32 %v687, 127
      %vm689 = vcmp.lt.s32.totalorder %v688, 73
      %v690 = vsel %vm689, %v684, %v686
      %v691 = vsel %vm689, %v682, %v684
      %v692 = vsel %vm689, %v680, %v682
      %v693 = vsel %vm689, %v686, %v680
      %v694 = vld [vmem:[%s10] ss:$8 sm:$0xf]
      %v696 = vlaneseq
      %v697 = vshrl.u32 %v696, 7
      %v698 = vsub.s32 0, %v697
      %v699 = vrot.slane %v694, %v698
      %v700 = vlaneseq
      %v701 = vshrl.u32 %v700, 7
      %v702 = vsub.s32 1, %v701
      %v703 = vrot.slane %v694, %v702
      %v704 = vlaneseq
      %v705 = vshrl.u32 %v704, 7
      %v706 = vsub.s32 2, %v705
      %v707 = vrot.slane %v694, %v706
      %v708 = vlaneseq
      %v709 = vshrl.u32 %v708, 7
      %v710 = vsub.s32 3, %v709
      %v711 = vrot.slane %v694, %v710
      %v716 = vmul.f32 %v693, %v699
      %v717 = vmul.f32 %v692, %v703
      %v718 = vmul.f32 %v691, %v707
      %v719 = vmul.f32 %v690, %v711
      %720 = vst [vmem:[#allocation2] sm:$0xff] %v716
      %721 = vst [vmem:[#allocation2 + $0x8] sm:$0xff] %v717
      %722 = vst [vmem:[#allocation2 + $0x10] sm:$0xff] %v718
      %723 = vst [vmem:[#allocation2 + $0x18] sm:$0xff] %v719
      %724 = vrot.lane.b32.xlu0 %v659, 72
      %v725 = vpop.permute.xlu0 %724
      %726 = vrot.lane.b32.xlu0 %v660, 72
      %v727 = vpop.permute.xlu0 %726
      %728 = vrot.lane.b32.xlu0 %v661, 72
      %v729 = vpop.permute.xlu0 %728
      %730 = vrot.lane.b32.xlu0 %v662, 72
      %v731 = vpop.permute.xlu0 %730
      %vm732 = vcmp.lt.s32.totalorder %v688, 72
      %v733 = vsel %vm732, %v729, %v731
      %v734 = vsel %vm732, %v727, %v729
      %v735 = vsel %vm732, %v725, %v727
      %v736 = vsel %vm732, %v731, %v725
      %s737 = scalar_lea.vmem %s10, 1
      %v738 = vld [vmem:[%s737] ss:$8 sm:$0xf]
      %v740 = vlaneseq
      %v741 = vshrl.u32 %v740, 7
      %v742 = vsub.s32 0, %v741
      %v743 = vrot.slane %v738, %v742
      %v744 = vlaneseq
      %v745 = vshrl.u32 %v744, 7
      %v746 = vsub.s32 1, %v745
      %v747 = vrot.slane %v738, %v746
      %v748 = vlaneseq
      %v749 = vshrl.u32 %v748, 7
      %v750 = vsub.s32 2, %v749
      %v751 = vrot.slane %v738, %v750
      %v752 = vlaneseq
      %v753 = vshrl.u32 %v752, 7
      %v754 = vsub.s32 3, %v753
      %v755 = vrot.slane %v738, %v754
      %v760 = vmul.f32 %v736, %v743
      %v761 = vmul.f32 %v735, %v747
      %v762 = vmul.f32 %v734, %v751
      %v763 = vmul.f32 %v733, %v755
      %764 = vst [vmem:[#allocation2 + $0x20] sm:$0xff] %v760
      %765 = vst [vmem:[#allocation2 + $0x28] sm:$0xff] %v761
      %766 = vst [vmem:[#allocation2 + $0x30] sm:$0xff] %v762
      %767 = vst [vmem:[#allocation2 + $0x38] sm:$0xff] %v763
      %768 = vrot.lane.b32.xlu0 %v659, 71
      %v769 = vpop.permute.xlu0 %768
      %770 = vrot.lane.b32.xlu0 %v660, 71
      %v771 = vpop.permute.xlu0 %770
      %772 = vrot.lane.b32.xlu0 %v661, 71
      %v773 = vpop.permute.xlu0 %772
      %774 = vrot.lane.b32.xlu0 %v662, 71
      %v775 = vpop.permute.xlu0 %774
      %vm776 = vcmp.lt.s32.totalorder %v688, 71
      %v777 = vsel %vm776, %v773, %v775
      %v778 = vsel %vm776, %v771, %v773
      %v779 = vsel %vm776, %v769, %v771
      %v780 = vsel %vm776, %v775, %v769
      %s781 = scalar_lea.vmem %s10, 2
      %v782 = vld [vmem:[%s781] ss:$8 sm:$0xf]
      %v784 = vlaneseq
      %v785 = vshrl.u32 %v784, 7
      %v786 = vsub.s32 0, %v785
      %v787 = vrot.slane %v782, %v786
      %v788 = vlaneseq
      %v789 = vshrl.u32 %v788, 7
      %v790 = vsub.s32 1, %v789
      %v791 = vrot.slane %v782, %v790
      %v792 = vlaneseq
      %v793 = vshrl.u32 %v792, 7
      %v794 = vsub.s32 2, %v793
      %v795 = vrot.slane %v782, %v794
      %v796 = vlaneseq
      %v797 = vshrl.u32 %v796, 7
      %v798 = vsub.s32 3, %v797
      %v799 = vrot.slane %v782, %v798
      %v804 = vmul.f32 %v780, %v787
      %v805 = vmul.f32 %v779, %v791
      %v806 = vmul.f32 %v778, %v795
      %v807 = vmul.f32 %v777, %v799
      %808 = vst [vmem:[#allocation2 + $0x40] sm:$0xff] %v804
      %809 = vst [vmem:[#allocation2 + $0x48] sm:$0xff] %v805
      %810 = vst [vmem:[#allocation2 + $0x50] sm:$0xff] %v806
      %811 = vst [vmem:[#allocation2 + $0x58] sm:$0xff] %v807
      %812 = vrot.lane.b32.xlu0 %v659, 65
      %v813 = vpop.permute.xlu0 %812
      %814 = vrot.lane.b32.xlu0 %v660, 65
      %v815 = vpop.permute.xlu0 %814
      %816 = vrot.lane.b32.xlu0 %v661, 65
      %v817 = vpop.permute.xlu0 %816
      %818 = vrot.lane.b32.xlu0 %v662, 65
      %v819 = vpop.permute.xlu0 %818
      %vm820 = vcmp.lt.s32.totalorder %v688, 65
      %v821 = vsel %vm820, %v817, %v819
      %v822 = vsel %vm820, %v815, %v817
      %v823 = vsel %vm820, %v813, %v815
      %v824 = vsel %vm820, %v819, %v813
      %s825 = scalar_lea.vmem %s10, 3
      %v826 = vld [vmem:[%s825] ss:$8 sm:$0xf]
      %v828 = vlaneseq
      %v829 = vshrl.u32 %v828, 7
      %v830 = vsub.s32 0, %v829
      %v831 = vrot.slane %v826, %v830
      %v832 = vlaneseq
      %v833 = vshrl.u32 %v832, 7
      %v834 = vsub.s32 1, %v833
      %v835 = vrot.slane %v826, %v834
      %v836 = vlaneseq
      %v837 = vshrl.u32 %v836, 7
      %v838 = vsub.s32 2, %v837
      %v839 = vrot.slane %v826, %v838
      %v840 = vlaneseq
      %v841 = vshrl.u32 %v840, 7
      %v842 = vsub.s32 3, %v841
      %v843 = vrot.slane %v826, %v842
      %v848 = vmul.f32 %v824, %v831
      %v849 = vmul.f32 %v823, %v835
      %v850 = vmul.f32 %v822, %v839
      %v851 = vmul.f32 %v821, %v843
      %852 = vst [vmem:[#allocation2 + $0x60] sm:$0xff] %v848
      %853 = vst [vmem:[#allocation2 + $0x68] sm:$0xff] %v849
      %854 = vst [vmem:[#allocation2 + $0x70] sm:$0xff] %v850
      %855 = vst [vmem:[#allocation2 + $0x78] sm:$0xff] %v851
      %856 = vrot.lane.b32.xlu0 %v659, 64
      %v857 = vpop.permute.xlu0 %856
      %858 = vrot.lane.b32.xlu0 %v660, 64
      %v859 = vpop.permute.xlu0 %858
      %860 = vrot.lane.b32.xlu0 %v661, 64
      %v861 = vpop.permute.xlu0 %860
      %862 = vrot.lane.b32.xlu0 %v662, 64
      %v863 = vpop.permute.xlu0 %862
      %vm864 = vcmp.lt.s32.totalorder %v688, 64
      %v865 = vsel %vm864, %v861, %v863
      %v866 = vsel %vm864, %v859, %v861
      %v867 = vsel %vm864, %v857, %v859
      %v868 = vsel %vm864, %v863, %v857
      %s869 = scalar_lea.vmem %s10, 4
      %v870 = vld [vmem:[%s869] ss:$8 sm:$0xf]
      %v872 = vlaneseq
      %v873 = vshrl.u32 %v872, 7
      %v874 = vsub.s32 0, %v873
      %v875 = vrot.slane %v870, %v874
      %v876 = vlaneseq
      %v877 = vshrl.u32 %v876, 7
      %v878 = vsub.s32 1, %v877
      %v879 = vrot.slane %v870, %v878
      %v880 = vlaneseq
      %v881 = vshrl.u32 %v880, 7
      %v882 = vsub.s32 2, %v881
      %v883 = vrot.slane %v870, %v882
      %v884 = vlaneseq
      %v885 = vshrl.u32 %v884, 7
      %v886 = vsub.s32 3, %v885
      %v887 = vrot.slane %v870, %v886
      %v892 = vmul.f32 %v868, %v875
      %v893 = vmul.f32 %v867, %v879
      %v894 = vmul.f32 %v866, %v883
      %v895 = vmul.f32 %v865, %v887
      %896 = vst [vmem:[#allocation2 + $0x80] sm:$0xff] %v892
      %897 = vst [vmem:[#allocation2 + $0x88] sm:$0xff] %v893
      %898 = vst [vmem:[#allocation2 + $0x90] sm:$0xff] %v894
      %899 = vst [vmem:[#allocation2 + $0x98] sm:$0xff] %v895
      %900 = vrot.lane.b32.xlu0 %v659, 63
      %v901 = vpop.permute.xlu0 %900
      %902 = vrot.lane.b32.xlu0 %v660, 63
      %v903 = vpop.permute.xlu0 %902
      %904 = vrot.lane.b32.xlu0 %v661, 63
      %v905 = vpop.permute.xlu0 %904
      %906 = vrot.lane.b32.xlu0 %v662, 63
      %v907 = vpop.permute.xlu0 %906
      %vm908 = vcmp.lt.s32.totalorder %v688, 63
      %v909 = vsel %vm908, %v905, %v907
      %v910 = vsel %vm908, %v903, %v905
      %v911 = vsel %vm908, %v901, %v903
      %v912 = vsel %vm908, %v907, %v901
      %s913 = scalar_lea.vmem %s10, 5
      %v914 = vld [vmem:[%s913] ss:$8 sm:$0xf]
      %v916 = vlaneseq
      %v917 = vshrl.u32 %v916, 7
      %v918 = vsub.s32 0, %v917
      %v919 = vrot.slane %v914, %v918
      %v920 = vlaneseq
      %v921 = vshrl.u32 %v920, 7
      %v922 = vsub.s32 1, %v921
      %v923 = vrot.slane %v914, %v922
      %v924 = vlaneseq
      %v925 = vshrl.u32 %v924, 7
      %v926 = vsub.s32 2, %v925
      %v927 = vrot.slane %v914, %v926
      %v928 = vlaneseq
      %v929 = vshrl.u32 %v928, 7
      %v930 = vsub.s32 3, %v929
      %v931 = vrot.slane %v914, %v930
      %v936 = vmul.f32 %v912, %v919
      %v937 = vmul.f32 %v911, %v923
      %v938 = vmul.f32 %v910, %v927
      %v939 = vmul.f32 %v909, %v931
      %940 = vst [vmem:[#allocation2 + $0xa0] sm:$0xff] %v936
      %941 = vst [vmem:[#allocation2 + $0xa8] sm:$0xff] %v937
      %942 = vst [vmem:[#allocation2 + $0xb0] sm:$0xff] %v938
      %943 = vst [vmem:[#allocation2 + $0xb8] sm:$0xff] %v939
      %944 = vrot.lane.b32.xlu0 %v659, 57
      %v945 = vpop.permute.xlu0 %944
      %946 = vrot.lane.b32.xlu0 %v660, 57
      %v947 = vpop.permute.xlu0 %946
      %948 = vrot.lane.b32.xlu0 %v661, 57
      %v949 = vpop.permute.xlu0 %948
      %950 = vrot.lane.b32.xlu0 %v662, 57
      %v951 = vpop.permute.xlu0 %950
      %vm952 = vcmp.lt.s32.totalorder %v688, 57
      %v953 = vsel %vm952, %v949, %v951
      %v954 = vsel %vm952, %v947, %v949
      %v955 = vsel %vm952, %v945, %v947
      %v956 = vsel %vm952, %v951, %v945
      %s957 = scalar_lea.vmem %s10, 6
      %v958 = vld [vmem:[%s957] ss:$8 sm:$0xf]
      %v960 = vlaneseq
      %v961 = vshrl.u32 %v960, 7
      %v962 = vsub.s32 0, %v961
      %v963 = vrot.slane %v958, %v962
      %v964 = vlaneseq
      %v965 = vshrl.u32 %v964, 7
      %v966 = vsub.s32 1, %v965
      %v967 = vrot.slane %v958, %v966
      %v968 = vlaneseq
      %v969 = vshrl.u32 %v968, 7
      %v970 = vsub.s32 2, %v969
      %v971 = vrot.slane %v958, %v970
      %v972 = vlaneseq
      %v973 = vshrl.u32 %v972, 7
      %v974 = vsub.s32 3, %v973
      %v975 = vrot.slane %v958, %v974
      %v980 = vmul.f32 %v956, %v963
      %v981 = vmul.f32 %v955, %v967
      %v982 = vmul.f32 %v954, %v971
      %v983 = vmul.f32 %v953, %v975
      %984 = vst [vmem:[#allocation2 + $0xc0] sm:$0xff] %v980
      %985 = vst [vmem:[#allocation2 + $0xc8] sm:$0xff] %v981
      %986 = vst [vmem:[#allocation2 + $0xd0] sm:$0xff] %v982
      %987 = vst [vmem:[#allocation2 + $0xd8] sm:$0xff] %v983
      %988 = vrot.lane.b32.xlu0 %v659, 56
      %v989 = vpop.permute.xlu0 %988
      %990 = vrot.lane.b32.xlu0 %v660, 56
      %v991 = vpop.permute.xlu0 %990
      %992 = vrot.lane.b32.xlu0 %v661, 56
      %v993 = vpop.permute.xlu0 %992
      %994 = vrot.lane.b32.xlu0 %v662, 56
      %v995 = vpop.permute.xlu0 %994
      %vm996 = vcmp.lt.s32.totalorder %v688, 56
      %v997 = vsel %vm996, %v993, %v995
      %v998 = vsel %vm996, %v991, %v993
      %v999 = vsel %vm996, %v989, %v991
      %v1000 = vsel %vm996, %v995, %v989
      %s1001 = scalar_lea.vmem %s10, 7
      %v1002 = vld [vmem:[%s1001] ss:$8 sm:$0xf]
      %v1004 = vlaneseq
      %v1005 = vshrl.u32 %v1004, 7
      %v1006 = vsub.s32 0, %v1005
      %v1007 = vrot.slane %v1002, %v1006
      %v1008 = vlaneseq
      %v1009 = vshrl.u32 %v1008, 7
      %v1010 = vsub.s32 1, %v1009
      %v1011 = vrot.slane %v1002, %v1010
      %v1012 = vlaneseq
      %v1013 = vshrl.u32 %v1012, 7
      %v1014 = vsub.s32 2, %v1013
      %v1015 = vrot.slane %v1002, %v1014
      %v1016 = vlaneseq
      %v1017 = vshrl.u32 %v1016, 7
      %v1018 = vsub.s32 3, %v1017
      %v1019 = vrot.slane %v1002, %v1018
      %v1024 = vmul.f32 %v1000, %v1007
      %v1025 = vmul.f32 %v999, %v1011
      %v1026 = vmul.f32 %v998, %v1015
      %v1027 = vmul.f32 %v997, %v1019
      %1028 = vst [vmem:[#allocation2 + $0xe0] sm:$0xff] %v1024
      %1029 = vst [vmem:[#allocation2 + $0xe8] sm:$0xff] %v1025
      %1030 = vst [vmem:[#allocation2 + $0xf0] sm:$0xff] %v1026
      %1031 = vst [vmem:[#allocation2 + $0xf8] sm:$0xff] %v1027
      %1032 = vrot.lane.b32.xlu0 %v659, 55
      %v1033 = vpop.permute.xlu0 %1032
      %1034 = vrot.lane.b32.xlu0 %v660, 55
      %v1035 = vpop.permute.xlu0 %1034
      %1036 = vrot.lane.b32.xlu0 %v661, 55
      %v1037 = vpop.permute.xlu0 %1036
      %1038 = vrot.lane.b32.xlu0 %v662, 55
      %v1039 = vpop.permute.xlu0 %1038
      %vm1040 = vcmp.lt.s32.totalorder %v688, 55
      %v1041 = vsel %vm1040, %v1037, %v1039
      %v1042 = vsel %vm1040, %v1035, %v1037
      %v1043 = vsel %vm1040, %v1033, %v1035
      %v1044 = vsel %vm1040, %v1039, %v1033
      %s1045 = scalar_lea.vmem %s10, 32
      %v1046 = vld [vmem:[%s1045] ss:$8 sm:$0xf]
      %v1048 = vlaneseq
      %v1049 = vshrl.u32 %v1048, 7
      %v1050 = vsub.s32 0, %v1049
      %v1051 = vrot.slane %v1046, %v1050
      %v1052 = vlaneseq
      %v1053 = vshrl.u32 %v1052, 7
      %v1054 = vsub.s32 1, %v1053
      %v1055 = vrot.slane %v1046, %v1054
      %v1056 = vlaneseq
      %v1057 = vshrl.u32 %v1056, 7
      %v1058 = vsub.s32 2, %v1057
      %v1059 = vrot.slane %v1046, %v1058
      %v1060 = vlaneseq
      %v1061 = vshrl.u32 %v1060, 7
      %v1062 = vsub.s32 3, %v1061
      %v1063 = vrot.slane %v1046, %v1062
      %v1068 = vmul.f32 %v1044, %v1051
      %v1069 = vmul.f32 %v1043, %v1055
      %v1070 = vmul.f32 %v1042, %v1059
      %v1071 = vmul.f32 %v1041, %v1063
      %1072 = vst [vmem:[#allocation2 + $0x100] sm:$0xff] %v1068
      %1073 = vst [vmem:[#allocation2 + $0x108] sm:$0xff] %v1069
      %1074 = vst [vmem:[#allocation2 + $0x110] sm:$0xff] %v1070
      %1075 = vst [vmem:[#allocation2 + $0x118] sm:$0xff] %v1071
      %1076 = vrot.lane.b32.xlu0 %v659, 9
      %v1077 = vpop.permute.xlu0 %1076
      %1078 = vrot.lane.b32.xlu0 %v660, 9
      %v1079 = vpop.permute.xlu0 %1078
      %1080 = vrot.lane.b32.xlu0 %v661, 9
      %v1081 = vpop.permute.xlu0 %1080
      %1082 = vrot.lane.b32.xlu0 %v662, 9
      %v1083 = vpop.permute.xlu0 %1082
      %vm1084 = vcmp.lt.s32.totalorder %v688, 9
      %v1085 = vsel %vm1084, %v1081, %v1083
      %v1086 = vsel %vm1084, %v1079, %v1081
      %v1087 = vsel %vm1084, %v1077, %v1079
      %v1088 = vsel %vm1084, %v1083, %v1077
      %s1089 = scalar_lea.vmem %s10, 33
      %v1090 = vld [vmem:[%s1089] ss:$8 sm:$0xf]
      %v1092 = vlaneseq
      %v1093 = vshrl.u32 %v1092, 7
      %v1094 = vsub.s32 0, %v1093
      %v1095 = vrot.slane %v1090, %v1094
      %v1096 = vlaneseq
      %v1097 = vshrl.u32 %v1096, 7
      %v1098 = vsub.s32 1, %v1097
      %v1099 = vrot.slane %v1090, %v1098
      %v1100 = vlaneseq
      %v1101 = vshrl.u32 %v1100, 7
      %v1102 = vsub.s32 2, %v1101
      %v1103 = vrot.slane %v1090, %v1102
      %v1104 = vlaneseq
      %v1105 = vshrl.u32 %v1104, 7
      %v1106 = vsub.s32 3, %v1105
      %v1107 = vrot.slane %v1090, %v1106
      %v1112 = vmul.f32 %v1088, %v1095
      %v1113 = vmul.f32 %v1087, %v1099
      %v1114 = vmul.f32 %v1086, %v1103
      %v1115 = vmul.f32 %v1085, %v1107
      %1116 = vst [vmem:[#allocation2 + $0x120] sm:$0xff] %v1112
      %1117 = vst [vmem:[#allocation2 + $0x128] sm:$0xff] %v1113
      %1118 = vst [vmem:[#allocation2 + $0x130] sm:$0xff] %v1114
      %1119 = vst [vmem:[#allocation2 + $0x138] sm:$0xff] %v1115
      %1120 = vrot.lane.b32.xlu0 %v659, 8
      %v1121 = vpop.permute.xlu0 %1120
      %1122 = vrot.lane.b32.xlu0 %v660, 8
      %v1123 = vpop.permute.xlu0 %1122
      %1124 = vrot.lane.b32.xlu0 %v661, 8
      %v1125 = vpop.permute.xlu0 %1124
      %1126 = vrot.lane.b32.xlu0 %v662, 8
      %v1127 = vpop.permute.xlu0 %1126
      %vm1128 = vcmp.lt.s32.totalorder %v688, 8
      %v1129 = vsel %vm1128, %v1125, %v1127
      %v1130 = vsel %vm1128, %v1123, %v1125
      %v1131 = vsel %vm1128, %v1121, %v1123
      %v1132 = vsel %vm1128, %v1127, %v1121
      %s1133 = scalar_lea.vmem %s10, 34
      %v1134 = vld [vmem:[%s1133] ss:$8 sm:$0xf]
      %v1136 = vlaneseq
      %v1137 = vshrl.u32 %v1136, 7
      %v1138 = vsub.s32 0, %v1137
      %v1139 = vrot.slane %v1134, %v1138
      %v1140 = vlaneseq
      %v1141 = vshrl.u32 %v1140, 7
      %v1142 = vsub.s32 1, %v1141
      %v1143 = vrot.slane %v1134, %v1142
      %v1144 = vlaneseq
      %v1145 = vshrl.u32 %v1144, 7
      %v1146 = vsub.s32 2, %v1145
      %v1147 = vrot.slane %v1134, %v1146
      %v1148 = vlaneseq
      %v1149 = vshrl.u32 %v1148, 7
      %v1150 = vsub.s32 3, %v1149
      %v1151 = vrot.slane %v1134, %v1150
      %v1156 = vmul.f32 %v1132, %v1139
      %v1157 = vmul.f32 %v1131, %v1143
      %v1158 = vmul.f32 %v1130, %v1147
      %v1159 = vmul.f32 %v1129, %v1151
      %1160 = vst [vmem:[#allocation2 + $0x140] sm:$0xff] %v1156
      %1161 = vst [vmem:[#allocation2 + $0x148] sm:$0xff] %v1157
      %1162 = vst [vmem:[#allocation2 + $0x150] sm:$0xff] %v1158
      %1163 = vst [vmem:[#allocation2 + $0x158] sm:$0xff] %v1159
      %1164 = vrot.lane.b32.xlu0 %v659, 7
      %v1165 = vpop.permute.xlu0 %1164
      %1166 = vrot.lane.b32.xlu0 %v660, 7
      %v1167 = vpop.permute.xlu0 %1166
      %1168 = vrot.lane.b32.xlu0 %v661, 7
      %v1169 = vpop.permute.xlu0 %1168
      %1170 = vrot.lane.b32.xlu0 %v662, 7
      %v1171 = vpop.permute.xlu0 %1170
      %vm1172 = vcmp.lt.s32.totalorder %v688, 7
      %v1173 = vsel %vm1172, %v1169, %v1171
      %v1174 = vsel %vm1172, %v1167, %v1169
      %v1175 = vsel %vm1172, %v1165, %v1167
      %v1176 = vsel %vm1172, %v1171, %v1165
      %s1177 = scalar_lea.vmem %s10, 35
      %v1178 = vld [vmem:[%s1177] ss:$8 sm:$0xf]
      %v1180 = vlaneseq
      %v1181 = vshrl.u32 %v1180, 7
      %v1182 = vsub.s32 0, %v1181
      %v1183 = vrot.slane %v1178, %v1182
      %v1184 = vlaneseq
      %v1185 = vshrl.u32 %v1184, 7
      %v1186 = vsub.s32 1, %v1185
      %v1187 = vrot.slane %v1178, %v1186
      %v1188 = vlaneseq
      %v1189 = vshrl.u32 %v1188, 7
      %v1190 = vsub.s32 2, %v1189
      %v1191 = vrot.slane %v1178, %v1190
      %v1192 = vlaneseq
      %v1193 = vshrl.u32 %v1192, 7
      %v1194 = vsub.s32 3, %v1193
      %v1195 = vrot.slane %v1178, %v1194
      %v1200 = vmul.f32 %v1176, %v1183
      %v1201 = vmul.f32 %v1175, %v1187
      %v1202 = vmul.f32 %v1174, %v1191
      %v1203 = vmul.f32 %v1173, %v1195
      %1204 = vst [vmem:[#allocation2 + $0x160] sm:$0xff] %v1200
      %1205 = vst [vmem:[#allocation2 + $0x168] sm:$0xff] %v1201
      %1206 = vst [vmem:[#allocation2 + $0x170] sm:$0xff] %v1202
      %1207 = vst [vmem:[#allocation2 + $0x178] sm:$0xff] %v1203
      %1208 = vrot.lane.b32.xlu0 %v659, 1
      %v1209 = vpop.permute.xlu0 %1208
      %1210 = vrot.lane.b32.xlu0 %v660, 1
      %v1211 = vpop.permute.xlu0 %1210
      %1212 = vrot.lane.b32.xlu0 %v661, 1
      %v1213 = vpop.permute.xlu0 %1212
      %1214 = vrot.lane.b32.xlu0 %v662, 1
      %v1215 = vpop.permute.xlu0 %1214
      %vm1216 = vcmp.lt.s32.totalorder %v688, 1
      %v1217 = vsel %vm1216, %v1213, %v1215
      %v1218 = vsel %vm1216, %v1211, %v1213
      %v1219 = vsel %vm1216, %v1209, %v1211
      %v1220 = vsel %vm1216, %v1215, %v1209
      %s1221 = scalar_lea.vmem %s10, 36
      %v1222 = vld [vmem:[%s1221] ss:$8 sm:$0xf]
      %v1224 = vlaneseq
      %v1225 = vshrl.u32 %v1224, 7
      %v1226 = vsub.s32 0, %v1225
      %v1227 = vrot.slane %v1222, %v1226
      %v1228 = vlaneseq
      %v1229 = vshrl.u32 %v1228, 7
      %v1230 = vsub.s32 1, %v1229
      %v1231 = vrot.slane %v1222, %v1230
      %v1232 = vlaneseq
      %v1233 = vshrl.u32 %v1232, 7
      %v1234 = vsub.s32 2, %v1233
      %v1235 = vrot.slane %v1222, %v1234
      %v1236 = vlaneseq
      %v1237 = vshrl.u32 %v1236, 7
      %v1238 = vsub.s32 3, %v1237
      %v1239 = vrot.slane %v1222, %v1238
      %v1244 = vmul.f32 %v1220, %v1227
      %v1245 = vmul.f32 %v1219, %v1231
      %v1246 = vmul.f32 %v1218, %v1235
      %v1247 = vmul.f32 %v1217, %v1239
      %1248 = vst [vmem:[#allocation2 + $0x180] sm:$0xff] %v1244
      %1249 = vst [vmem:[#allocation2 + $0x188] sm:$0xff] %v1245
      %1250 = vst [vmem:[#allocation2 + $0x190] sm:$0xff] %v1246
      %1251 = vst [vmem:[#allocation2 + $0x198] sm:$0xff] %v1247
      %s1252 = scalar_lea.vmem %s10, 37
      %v1253 = vld [vmem:[%s1252] ss:$8 sm:$0xf]
      %v1255 = vlaneseq
      %v1256 = vshrl.u32 %v1255, 7
      %v1257 = vsub.s32 0, %v1256
      %v1258 = vrot.slane %v1253, %v1257
      %v1259 = vlaneseq
      %v1260 = vshrl.u32 %v1259, 7
      %v1261 = vsub.s32 1, %v1260
      %v1262 = vrot.slane %v1253, %v1261
      %v1263 = vlaneseq
      %v1264 = vshrl.u32 %v1263, 7
      %v1265 = vsub.s32 2, %v1264
      %v1266 = vrot.slane %v1253, %v1265
      %v1267 = vlaneseq
      %v1268 = vshrl.u32 %v1267, 7
      %v1269 = vsub.s32 3, %v1268
      %v1270 = vrot.slane %v1253, %v1269
      %v1275 = vmul.f32 %v659, %v1258
      %v1276 = vmul.f32 %v660, %v1262
      %v1277 = vmul.f32 %v661, %v1266
      %v1278 = vmul.f32 %v662, %v1270
      %1279 = vst [vmem:[#allocation2 + $0x1a0] sm:$0xff] %v1275
      %1280 = vst [vmem:[#allocation2 + $0x1a8] sm:$0xff] %v1276
      %1281 = vst [vmem:[#allocation2 + $0x1b0] sm:$0xff] %v1277
      %1282 = vst [vmem:[#allocation2 + $0x1b8] sm:$0xff] %v1278
      %1283 = vrot.lane.b32.xlu0 %v659, 127
      %v1284 = vpop.permute.xlu0 %1283
      %1285 = vrot.lane.b32.xlu0 %v660, 127
      %v1286 = vpop.permute.xlu0 %1285
      %1287 = vrot.lane.b32.xlu0 %v661, 127
      %v1288 = vpop.permute.xlu0 %1287
      %1289 = vrot.lane.b32.xlu0 %v662, 127
      %v1290 = vpop.permute.xlu0 %1289
      %vm1291 = vcmp.lt.s32.totalorder %v688, 127
      %v1292 = vsel %vm1291, %v1288, %v1290
      %v1293 = vsel %vm1291, %v1286, %v1288
      %v1294 = vsel %vm1291, %v1284, %v1286
      %v1295 = vsel %vm1291, %v1290, %v1284
      %s1296 = scalar_lea.vmem %s10, 38
      %v1297 = vld [vmem:[%s1296] ss:$8 sm:$0xf]
      %v1299 = vlaneseq
      %v1300 = vshrl.u32 %v1299, 7
      %v1301 = vsub.s32 0, %v1300
      %v1302 = vrot.slane %v1297, %v1301
      %v1303 = vlaneseq
      %v1304 = vshrl.u32 %v1303, 7
      %v1305 = vsub.s32 1, %v1304
      %v1306 = vrot.slane %v1297, %v1305
      %v1307 = vlaneseq
      %v1308 = vshrl.u32 %v1307, 7
      %v1309 = vsub.s32 2, %v1308
      %v1310 = vrot.slane %v1297, %v1309
      %v1311 = vlaneseq
      %v1312 = vshrl.u32 %v1311, 7
      %v1313 = vsub.s32 3, %v1312
      %v1314 = vrot.slane %v1297, %v1313
      %v1319 = vmul.f32 %v1294, %v1302
      %v1320 = vmul.f32 %v1293, %v1306
      %v1321 = vmul.f32 %v1292, %v1310
      %v1322 = vmul.f32 %v1295, %v1314
      %1323 = vst [vmem:[#allocation2 + $0x1c0] sm:$0xff] %v1319
      %1324 = vst [vmem:[#allocation2 + $0x1c8] sm:$0xff] %v1320
      %1325 = vst [vmem:[#allocation2 + $0x1d0] sm:$0xff] %v1321
      %1326 = vst [vmem:[#allocation2 + $0x1d8] sm:$0xff] %v1322
      %1327 = vrot.lane.b32.xlu0 %v659, 121
      %v1328 = vpop.permute.xlu0 %1327
      %1329 = vrot.lane.b32.xlu0 %v660, 121
      %v1330 = vpop.permute.xlu0 %1329
      %1331 = vrot.lane.b32.xlu0 %v661, 121
      %v1332 = vpop.permute.xlu0 %1331
      %1333 = vrot.lane.b32.xlu0 %v662, 121
      %v1334 = vpop.permute.xlu0 %1333
      %vm1335 = vcmp.lt.s32.totalorder %v688, 121
      %v1336 = vsel %vm1335, %v1332, %v1334
      %v1337 = vsel %vm1335, %v1330, %v1332
      %v1338 = vsel %vm1335, %v1328, %v1330
      %v1339 = vsel %vm1335, %v1334, %v1328
      %s1340 = scalar_lea.vmem %s10, 39
      %v1341 = vld [vmem:[%s1340] ss:$8 sm:$0xf]
      %v1343 = vlaneseq
      %v1344 = vshrl.u32 %v1343, 7
      %v1345 = vsub.s32 0, %v1344
      %v1346 = vrot.slane %v1341, %v1345
      %v1347 = vlaneseq
      %v1348 = vshrl.u32 %v1347, 7
      %v1349 = vsub.s32 1, %v1348
      %v1350 = vrot.slane %v1341, %v1349
      %v1351 = vlaneseq
      %v1352 = vshrl.u32 %v1351, 7
      %v1353 = vsub.s32 2, %v1352
      %v1354 = vrot.slane %v1341, %v1353
      %v1355 = vlaneseq
      %v1356 = vshrl.u32 %v1355, 7
      %v1357 = vsub.s32 3, %v1356
      %v1358 = vrot.slane %v1341, %v1357
      %v1363 = vmul.f32 %v1338, %v1346
      %v1364 = vmul.f32 %v1337, %v1350
      %v1365 = vmul.f32 %v1336, %v1354
      %v1366 = vmul.f32 %v1339, %v1358
      %1367 = vst [vmem:[#allocation2 + $0x1e0] sm:$0xff] %v1363
      %1368 = vst [vmem:[#allocation2 + $0x1e8] sm:$0xff] %v1364
      %1369 = vst [vmem:[#allocation2 + $0x1f0] sm:$0xff] %v1365
      %1370 = vst [vmem:[#allocation2 + $0x1f8] sm:$0xff] %v1366
      %1371 = vrot.lane.b32.xlu0 %v659, 120
      %v1372 = vpop.permute.xlu0 %1371
      %1373 = vrot.lane.b32.xlu0 %v660, 120
      %v1374 = vpop.permute.xlu0 %1373
      %1375 = vrot.lane.b32.xlu0 %v661, 120
      %v1376 = vpop.permute.xlu0 %1375
      %1377 = vrot.lane.b32.xlu0 %v662, 120
      %v1378 = vpop.permute.xlu0 %1377
      %vm1379 = vcmp.lt.s32.totalorder %v688, 120
      %v1380 = vsel %vm1379, %v1376, %v1378
      %v1381 = vsel %vm1379, %v1374, %v1376
      %v1382 = vsel %vm1379, %v1372, %v1374
      %v1383 = vsel %vm1379, %v1378, %v1372
      %s1384 = scalar_lea.vmem %s10, 64
      %v1385 = vld [vmem:[%s1384] ss:$8 sm:$0xf]
      %v1387 = vlaneseq
      %v1388 = vshrl.u32 %v1387, 7
      %v1389 = vsub.s32 0, %v1388
      %v1390 = vrot.slane %v1385, %v1389
      %v1391 = vlaneseq
      %v1392 = vshrl.u32 %v1391, 7
      %v1393 = vsub.s32 1, %v1392
      %v1394 = vrot.slane %v1385, %v1393
      %v1395 = vlaneseq
      %v1396 = vshrl.u32 %v1395, 7
      %v1397 = vsub.s32 2, %v1396
      %v1398 = vrot.slane %v1385, %v1397
      %v1399 = vlaneseq
      %v1400 = vshrl.u32 %v1399, 7
      %v1401 = vsub.s32 3, %v1400
      %v1402 = vrot.slane %v1385, %v1401
      %v1407 = vmul.f32 %v1382, %v1390
      %v1408 = vmul.f32 %v1381, %v1394
      %v1409 = vmul.f32 %v1380, %v1398
      %v1410 = vmul.f32 %v1383, %v1402
      %1411 = vst [vmem:[#allocation2 + $0x200] sm:$0xff] %v1407
      %1412 = vst [vmem:[#allocation2 + $0x208] sm:$0xff] %v1408
      %1413 = vst [vmem:[#allocation2 + $0x210] sm:$0xff] %v1409
      %1414 = vst [vmem:[#allocation2 + $0x218] sm:$0xff] %v1410
      %1415 = vrot.lane.b32.xlu0 %v659, 119
      %v1416 = vpop.permute.xlu0 %1415
      %1417 = vrot.lane.b32.xlu0 %v660, 119
      %v1418 = vpop.permute.xlu0 %1417
      %1419 = vrot.lane.b32.xlu0 %v661, 119
      %v1420 = vpop.permute.xlu0 %1419
      %1421 = vrot.lane.b32.xlu0 %v662, 119
      %v1422 = vpop.permute.xlu0 %1421
      %vm1423 = vcmp.lt.s32.totalorder %v688, 119
      %v1424 = vsel %vm1423, %v1420, %v1422
      %v1425 = vsel %vm1423, %v1418, %v1420
      %v1426 = vsel %vm1423, %v1416, %v1418
      %v1427 = vsel %vm1423, %v1422, %v1416
      %s1428 = scalar_lea.vmem %s10, 65
      %v1429 = vld [vmem:[%s1428] ss:$8 sm:$0xf]
      %v1431 = vlaneseq
      %v1432 = vshrl.u32 %v1431, 7
      %v1433 = vsub.s32 0, %v1432
      %v1434 = vrot.slane %v1429, %v1433
      %v1435 = vlaneseq
      %v1436 = vshrl.u32 %v1435, 7
      %v1437 = vsub.s32 1, %v1436
      %v1438 = vrot.slane %v1429, %v1437
      %v1439 = vlaneseq
      %v1440 = vshrl.u32 %v1439, 7
      %v1441 = vsub.s32 2, %v1440
      %v1442 = vrot.slane %v1429, %v1441
      %v1443 = vlaneseq
      %v1444 = vshrl.u32 %v1443, 7
      %v1445 = vsub.s32 3, %v1444
      %v1446 = vrot.slane %v1429, %v1445
      %v1451 = vmul.f32 %v1426, %v1434
      %v1452 = vmul.f32 %v1425, %v1438
      %v1453 = vmul.f32 %v1424, %v1442
      %v1454 = vmul.f32 %v1427, %v1446
      %1455 = vst [vmem:[#allocation2 + $0x220] sm:$0xff] %v1451
      %1456 = vst [vmem:[#allocation2 + $0x228] sm:$0xff] %v1452
      %1457 = vst [vmem:[#allocation2 + $0x230] sm:$0xff] %v1453
      %1458 = vst [vmem:[#allocation2 + $0x238] sm:$0xff] %v1454
      %s1459 = scalar_lea.vmem %s10, 66
      %v1460 = vld [vmem:[%s1459] ss:$8 sm:$0xf]
      %v1462 = vlaneseq
      %v1463 = vshrl.u32 %v1462, 7
      %v1464 = vsub.s32 0, %v1463
      %v1465 = vrot.slane %v1460, %v1464
      %v1466 = vlaneseq
      %v1467 = vshrl.u32 %v1466, 7
      %v1468 = vsub.s32 1, %v1467
      %v1469 = vrot.slane %v1460, %v1468
      %v1470 = vlaneseq
      %v1471 = vshrl.u32 %v1470, 7
      %v1472 = vsub.s32 2, %v1471
      %v1473 = vrot.slane %v1460, %v1472
      %v1474 = vlaneseq
      %v1475 = vshrl.u32 %v1474, 7
      %v1476 = vsub.s32 3, %v1475
      %v1477 = vrot.slane %v1460, %v1476
      %v1482 = vmul.f32 %v692, %v1465
      %v1483 = vmul.f32 %v691, %v1469
      %v1484 = vmul.f32 %v690, %v1473
      %v1485 = vmul.f32 %v693, %v1477
      %1486 = vst [vmem:[#allocation2 + $0x240] sm:$0xff] %v1482
      %1487 = vst [vmem:[#allocation2 + $0x248] sm:$0xff] %v1483
      %1488 = vst [vmem:[#allocation2 + $0x250] sm:$0xff] %v1484
      %1489 = vst [vmem:[#allocation2 + $0x258] sm:$0xff] %v1485
      %s1490 = scalar_lea.vmem %s10, 67
      %v1491 = vld [vmem:[%s1490] ss:$8 sm:$0xf]
      %v1493 = vlaneseq
      %v1494 = vshrl.u32 %v1493, 7
      %v1495 = vsub.s32 0, %v1494
      %v1496 = vrot.slane %v1491, %v1495
      %v1497 = vlaneseq
      %v1498 = vshrl.u32 %v1497, 7
      %v1499 = vsub.s32 1, %v1498
      %v1500 = vrot.slane %v1491, %v1499
      %v1501 = vlaneseq
      %v1502 = vshrl.u32 %v1501, 7
      %v1503 = vsub.s32 2, %v1502
      %v1504 = vrot.slane %v1491, %v1503
      %v1505 = vlaneseq
      %v1506 = vshrl.u32 %v1505, 7
      %v1507 = vsub.s32 3, %v1506
      %v1508 = vrot.slane %v1491, %v1507
      %v1513 = vmul.f32 %v735, %v1496
      %v1514 = vmul.f32 %v734, %v1500
      %v1515 = vmul.f32 %v733, %v1504
      %v1516 = vmul.f32 %v736, %v1508
      %1517 = vst [vmem:[#allocation2 + $0x260] sm:$0xff] %v1513
      %1518 = vst [vmem:[#allocation2 + $0x268] sm:$0xff] %v1514
      %1519 = vst [vmem:[#allocation2 + $0x270] sm:$0xff] %v1515
      %1520 = vst [vmem:[#allocation2 + $0x278] sm:$0xff] %v1516
      %s1521 = scalar_lea.vmem %s10, 68
      %v1522 = vld [vmem:[%s1521] ss:$8 sm:$0xf]
      %v1524 = vlaneseq
      %v1525 = vshrl.u32 %v1524, 7
      %v1526 = vsub.s32 0, %v1525
      %v1527 = vrot.slane %v1522, %v1526
      %v1528 = vlaneseq
      %v1529 = vshrl.u32 %v1528, 7
      %v1530 = vsub.s32 1, %v1529
      %v1531 = vrot.slane %v1522, %v1530
      %v1532 = vlaneseq
      %v1533 = vshrl.u32 %v1532, 7
      %v1534 = vsub.s32 2, %v1533
      %v1535 = vrot.slane %v1522, %v1534
      %v1536 = vlaneseq
      %v1537 = vshrl.u32 %v1536, 7
      %v1538 = vsub.s32 3, %v1537
      %v1539 = vrot.slane %v1522, %v1538
      %v1544 = vmul.f32 %v779, %v1527
      %v1545 = vmul.f32 %v778, %v1531
      %v1546 = vmul.f32 %v777, %v1535
      %v1547 = vmul.f32 %v780, %v1539
      %1548 = vst [vmem:[#allocation2 + $0x280] sm:$0xff] %v1544
      %1549 = vst [vmem:[#allocation2 + $0x288] sm:$0xff] %v1545
      %1550 = vst [vmem:[#allocation2 + $0x290] sm:$0xff] %v1546
      %1551 = vst [vmem:[#allocation2 + $0x298] sm:$0xff] %v1547
      %s1552 = scalar_lea.vmem %s10, 69
      %v1553 = vld [vmem:[%s1552] ss:$8 sm:$0xf]
      %v1555 = vlaneseq
      %v1556 = vshrl.u32 %v1555, 7
      %v1557 = vsub.s32 0, %v1556
      %v1558 = vrot.slane %v1553, %v1557
      %v1559 = vlaneseq
      %v1560 = vshrl.u32 %v1559, 7
      %v1561 = vsub.s32 1, %v1560
      %v1562 = vrot.slane %v1553, %v1561
      %v1563 = vlaneseq
      %v1564 = vshrl.u32 %v1563, 7
      %v1565 = vsub.s32 2, %v1564
      %v1566 = vrot.slane %v1553, %v1565
      %v1567 = vlaneseq
      %v1568 = vshrl.u32 %v1567, 7
      %v1569 = vsub.s32 3, %v1568
      %v1570 = vrot.slane %v1553, %v1569
      %v1575 = vmul.f32 %v823, %v1558
      %v1576 = vmul.f32 %v822, %v1562
      %v1577 = vmul.f32 %v821, %v1566
      %v1578 = vmul.f32 %v824, %v1570
      %1579 = vst [vmem:[#allocation2 + $0x2a0] sm:$0xff] %v1575
      %1580 = vst [vmem:[#allocation2 + $0x2a8] sm:$0xff] %v1576
      %1581 = vst [vmem:[#allocation2 + $0x2b0] sm:$0xff] %v1577
      %1582 = vst [vmem:[#allocation2 + $0x2b8] sm:$0xff] %v1578
      %s1583 = scalar_lea.vmem %s10, 70
      %v1584 = vld [vmem:[%s1583] ss:$8 sm:$0xf]
      %v1586 = vlaneseq
      %v1587 = vshrl.u32 %v1586, 7
      %v1588 = vsub.s32 0, %v1587
      %v1589 = vrot.slane %v1584, %v1588
      %v1590 = vlaneseq
      %v1591 = vshrl.u32 %v1590, 7
      %v1592 = vsub.s32 1, %v1591
      %v1593 = vrot.slane %v1584, %v1592
      %v1594 = vlaneseq
      %v1595 = vshrl.u32 %v1594, 7
      %v1596 = vsub.s32 2, %v1595
      %v1597 = vrot.slane %v1584, %v1596
      %v1598 = vlaneseq
      %v1599 = vshrl.u32 %v1598, 7
      %v1600 = vsub.s32 3, %v1599
      %v1601 = vrot.slane %v1584, %v1600
      %v1606 = vmul.f32 %v867, %v1589
      %v1607 = vmul.f32 %v866, %v1593
      %v1608 = vmul.f32 %v865, %v1597
      %v1609 = vmul.f32 %v868, %v1601
      %1610 = vst [vmem:[#allocation2 + $0x2c0] sm:$0xff] %v1606
      %1611 = vst [vmem:[#allocation2 + $0x2c8] sm:$0xff] %v1607
      %1612 = vst [vmem:[#allocation2 + $0x2d0] sm:$0xff] %v1608
      %1613 = vst [vmem:[#allocation2 + $0x2d8] sm:$0xff] %v1609
      %s1614 = scalar_lea.vmem %s10, 71
      %v1615 = vld [vmem:[%s1614] ss:$8 sm:$0xf]
      %v1617 = vlaneseq
      %v1618 = vshrl.u32 %v1617, 7
      %v1619 = vsub.s32 0, %v1618
      %v1620 = vrot.slane %v1615, %v1619
      %v1621 = vlaneseq
      %v1622 = vshrl.u32 %v1621, 7
      %v1623 = vsub.s32 1, %v1622
      %v1624 = vrot.slane %v1615, %v1623
      %v1625 = vlaneseq
      %v1626 = vshrl.u32 %v1625, 7
      %v1627 = vsub.s32 2, %v1626
      %v1628 = vrot.slane %v1615, %v1627
      %v1629 = vlaneseq
      %v1630 = vshrl.u32 %v1629, 7
      %v1631 = vsub.s32 3, %v1630
      %v1632 = vrot.slane %v1615, %v1631
      %v1637 = vmul.f32 %v911, %v1620
      %v1638 = vmul.f32 %v910, %v1624
      %v1639 = vmul.f32 %v909, %v1628
      %v1640 = vmul.f32 %v912, %v1632
      %1641 = vst [vmem:[#allocation2 + $0x2e0] sm:$0xff] %v1637
      %1642 = vst [vmem:[#allocation2 + $0x2e8] sm:$0xff] %v1638
      %1643 = vst [vmem:[#allocation2 + $0x2f0] sm:$0xff] %v1639
      %1644 = vst [vmem:[#allocation2 + $0x2f8] sm:$0xff] %v1640
      %s1645 = scalar_lea.vmem %s10, 96
      %v1646 = vld [vmem:[%s1645] ss:$8 sm:$0xf]
      %v1648 = vlaneseq
      %v1649 = vshrl.u32 %v1648, 7
      %v1650 = vsub.s32 0, %v1649
      %v1651 = vrot.slane %v1646, %v1650
      %v1652 = vlaneseq
      %v1653 = vshrl.u32 %v1652, 7
      %v1654 = vsub.s32 1, %v1653
      %v1655 = vrot.slane %v1646, %v1654
      %v1656 = vlaneseq
      %v1657 = vshrl.u32 %v1656, 7
      %v1658 = vsub.s32 2, %v1657
      %v1659 = vrot.slane %v1646, %v1658
      %v1660 = vlaneseq
      %v1661 = vshrl.u32 %v1660, 7
      %v1662 = vsub.s32 3, %v1661
      %v1663 = vrot.slane %v1646, %v1662
      %v1668 = vmul.f32 %v955, %v1651
      %v1669 = vmul.f32 %v954, %v1655
      %v1670 = vmul.f32 %v953, %v1659
      %v1671 = vmul.f32 %v956, %v1663
      %1672 = vst [vmem:[#allocation2 + $0x300] sm:$0xff] %v1668
      %1673 = vst [vmem:[#allocation2 + $0x308] sm:$0xff] %v1669
      %1674 = vst [vmem:[#allocation2 + $0x310] sm:$0xff] %v1670
      %1675 = vst [vmem:[#allocation2 + $0x318] sm:$0xff] %v1671
      %s1676 = scalar_lea.vmem %s10, 97
      %v1677 = vld [vmem:[%s1676] ss:$8 sm:$0xf]
      %v1679 = vlaneseq
      %v1680 = vshrl.u32 %v1679, 7
      %v1681 = vsub.s32 0, %v1680
      %v1682 = vrot.slane %v1677, %v1681
      %v1683 = vlaneseq
      %v1684 = vshrl.u32 %v1683, 7
      %v1685 = vsub.s32 1, %v1684
      %v1686 = vrot.slane %v1677, %v1685
      %v1687 = vlaneseq
      %v1688 = vshrl.u32 %v1687, 7
      %v1689 = vsub.s32 2, %v1688
      %v1690 = vrot.slane %v1677, %v1689
      %v1691 = vlaneseq
      %v1692 = vshrl.u32 %v1691, 7
      %v1693 = vsub.s32 3, %v1692
      %v1694 = vrot.slane %v1677, %v1693
      %v1699 = vmul.f32 %v999, %v1682
      %v1700 = vmul.f32 %v998, %v1686
      %v1701 = vmul.f32 %v997, %v1690
      %v1702 = vmul.f32 %v1000, %v1694
      %1703 = vst [vmem:[#allocation2 + $0x320] sm:$0xff] %v1699
      %1704 = vst [vmem:[#allocation2 + $0x328] sm:$0xff] %v1700
      %1705 = vst [vmem:[#allocation2 + $0x330] sm:$0xff] %v1701
      %1706 = vst [vmem:[#allocation2 + $0x338] sm:$0xff] %v1702
      %s1707 = scalar_lea.vmem %s10, 98
      %v1708 = vld [vmem:[%s1707] ss:$8 sm:$0xf]
      %v1710 = vlaneseq
      %v1711 = vshrl.u32 %v1710, 7
      %v1712 = vsub.s32 0, %v1711
      %v1713 = vrot.slane %v1708, %v1712
      %v1714 = vlaneseq
      %v1715 = vshrl.u32 %v1714, 7
      %v1716 = vsub.s32 1, %v1715
      %v1717 = vrot.slane %v1708, %v1716
      %v1718 = vlaneseq
      %v1719 = vshrl.u32 %v1718, 7
      %v1720 = vsub.s32 2, %v1719
      %v1721 = vrot.slane %v1708, %v1720
      %v1722 = vlaneseq
      %v1723 = vshrl.u32 %v1722, 7
      %v1724 = vsub.s32 3, %v1723
      %v1725 = vrot.slane %v1708, %v1724
      %v1730 = vmul.f32 %v1043, %v1713
      %v1731 = vmul.f32 %v1042, %v1717
      %v1732 = vmul.f32 %v1041, %v1721
      %v1733 = vmul.f32 %v1044, %v1725
      %1734 = vst [vmem:[#allocation2 + $0x340] sm:$0xff] %v1730
      %1735 = vst [vmem:[#allocation2 + $0x348] sm:$0xff] %v1731
      %1736 = vst [vmem:[#allocation2 + $0x350] sm:$0xff] %v1732
      %1737 = vst [vmem:[#allocation2 + $0x358] sm:$0xff] %v1733
      %v1738 = vld [vmem:[%s4] sm:$0xff]
      %v1739 = vld [vmem:[#allocation2] sm:$0xff]
      %v1740 = vld [vmem:[#allocation2 + $0x8] sm:$0xff]
      %v1741 = vld [vmem:[#allocation2 + $0x10] sm:$0xff]
      %v1742 = vld [vmem:[#allocation2 + $0x18] sm:$0xff]
      %v1743 = vld [vmem:[#allocation2 + $0x20] sm:$0xff]
      %v1744 = vld [vmem:[#allocation2 + $0x28] sm:$0xff]
      %v1745 = vld [vmem:[#allocation2 + $0x30] sm:$0xff]
      %v1746 = vld [vmem:[#allocation2 + $0x38] sm:$0xff]
      %v1747 = vld [vmem:[#allocation2 + $0x40] sm:$0xff]
      %v1748 = vld [vmem:[#allocation2 + $0x48] sm:$0xff]
      %v1749 = vld [vmem:[#allocation2 + $0x50] sm:$0xff]
      %v1750 = vld [vmem:[#allocation2 + $0x58] sm:$0xff]
      %v1751 = vld [vmem:[#allocation2 + $0x60] sm:$0xff]
      %v1752 = vld [vmem:[#allocation2 + $0x68] sm:$0xff]
      %v1753 = vld [vmem:[#allocation2 + $0x70] sm:$0xff]
      %v1754 = vld [vmem:[#allocation2 + $0x78] sm:$0xff]
      %v1755 = vld [vmem:[#allocation2 + $0x80] sm:$0xff]
      %v1756 = vld [vmem:[#allocation2 + $0x88] sm:$0xff]
      %v1757 = vld [vmem:[#allocation2 + $0x90] sm:$0xff]
      %v1758 = vld [vmem:[#allocation2 + $0x98] sm:$0xff]
      %v1759 = vld [vmem:[#allocation2 + $0xa0] sm:$0xff]
      %v1760 = vld [vmem:[#allocation2 + $0xa8] sm:$0xff]
      %v1761 = vld [vmem:[#allocation2 + $0xb0] sm:$0xff]
      %v1762 = vld [vmem:[#allocation2 + $0xb8] sm:$0xff]
      %v1763 = vld [vmem:[#allocation2 + $0xc0] sm:$0xff]
      %v1764 = vld [vmem:[#allocation2 + $0xc8] sm:$0xff]
      %v1765 = vld [vmem:[#allocation2 + $0xd0] sm:$0xff]
      %v1766 = vld [vmem:[#allocation2 + $0xd8] sm:$0xff]
      %v1767 = vld [vmem:[#allocation2 + $0xe0] sm:$0xff]
      %v1768 = vld [vmem:[#allocation2 + $0xe8] sm:$0xff]
      %v1769 = vld [vmem:[#allocation2 + $0xf0] sm:$0xff]
      %v1770 = vld [vmem:[#allocation2 + $0xf8] sm:$0xff]
      %v1771 = vld [vmem:[#allocation2 + $0x100] sm:$0xff]
      %v1772 = vld [vmem:[#allocation2 + $0x108] sm:$0xff]
      %v1773 = vld [vmem:[#allocation2 + $0x110] sm:$0xff]
      %v1774 = vld [vmem:[#allocation2 + $0x118] sm:$0xff]
      %v1775 = vld [vmem:[#allocation2 + $0x120] sm:$0xff]
      %v1776 = vld [vmem:[#allocation2 + $0x128] sm:$0xff]
      %v1777 = vld [vmem:[#allocation2 + $0x130] sm:$0xff]
      %v1778 = vld [vmem:[#allocation2 + $0x138] sm:$0xff]
      %v1779 = vld [vmem:[#allocation2 + $0x140] sm:$0xff]
      %v1780 = vld [vmem:[#allocation2 + $0x148] sm:$0xff]
      %v1781 = vld [vmem:[#allocation2 + $0x150] sm:$0xff]
      %v1782 = vld [vmem:[#allocation2 + $0x158] sm:$0xff]
      %v1783 = vld [vmem:[#allocation2 + $0x160] sm:$0xff]
      %v1784 = vld [vmem:[#allocation2 + $0x168] sm:$0xff]
      %v1785 = vld [vmem:[#allocation2 + $0x170] sm:$0xff]
      %v1786 = vld [vmem:[#allocation2 + $0x178] sm:$0xff]
      %v1787 = vld [vmem:[#allocation2 + $0x180] sm:$0xff]
      %v1788 = vld [vmem:[#allocation2 + $0x188] sm:$0xff]
      %v1789 = vld [vmem:[#allocation2 + $0x190] sm:$0xff]
      %v1790 = vld [vmem:[#allocation2 + $0x198] sm:$0xff]
      %v1791 = vld [vmem:[#allocation2 + $0x1a0] sm:$0xff]
      %v1792 = vld [vmem:[#allocation2 + $0x1a8] sm:$0xff]
      %v1793 = vld [vmem:[#allocation2 + $0x1b0] sm:$0xff]
      %v1794 = vld [vmem:[#allocation2 + $0x1b8] sm:$0xff]
      %v1795 = vld [vmem:[#allocation2 + $0x1c0] sm:$0xff]
      %v1796 = vld [vmem:[#allocation2 + $0x1c8] sm:$0xff]
      %v1797 = vld [vmem:[#allocation2 + $0x1d0] sm:$0xff]
      %v1798 = vld [vmem:[#allocation2 + $0x1d8] sm:$0xff]
      %v1799 = vld [vmem:[#allocation2 + $0x1e0] sm:$0xff]
      %v1800 = vld [vmem:[#allocation2 + $0x1e8] sm:$0xff]
      %v1801 = vld [vmem:[#allocation2 + $0x1f0] sm:$0xff]
      %v1802 = vld [vmem:[#allocation2 + $0x1f8] sm:$0xff]
      %v1803 = vld [vmem:[#allocation2 + $0x200] sm:$0xff]
      %v1804 = vld [vmem:[#allocation2 + $0x208] sm:$0xff]
      %v1805 = vld [vmem:[#allocation2 + $0x210] sm:$0xff]
      %v1806 = vld [vmem:[#allocation2 + $0x218] sm:$0xff]
      %v1807 = vld [vmem:[#allocation2 + $0x220] sm:$0xff]
      %v1808 = vld [vmem:[#allocation2 + $0x228] sm:$0xff]
      %v1809 = vld [vmem:[#allocation2 + $0x230] sm:$0xff]
      %v1810 = vld [vmem:[#allocation2 + $0x238] sm:$0xff]
      %v1811 = vld [vmem:[#allocation2 + $0x240] sm:$0xff]
      %v1812 = vld [vmem:[#allocation2 + $0x248] sm:$0xff]
      %v1813 = vld [vmem:[#allocation2 + $0x250] sm:$0xff]
      %v1814 = vld [vmem:[#allocation2 + $0x258] sm:$0xff]
      %v1815 = vld [vmem:[#allocation2 + $0x260] sm:$0xff]
      %v1816 = vld [vmem:[#allocation2 + $0x268] sm:$0xff]
      %v1817 = vld [vmem:[#allocation2 + $0x270] sm:$0xff]
      %v1818 = vld [vmem:[#allocation2 + $0x278] sm:$0xff]
      %v1819 = vld [vmem:[#allocation2 + $0x280] sm:$0xff]
      %v1820 = vld [vmem:[#allocation2 + $0x288] sm:$0xff]
      %v1821 = vld [vmem:[#allocation2 + $0x290] sm:$0xff]
      %v1822 = vld [vmem:[#allocation2 + $0x298] sm:$0xff]
      %v1823 = vld [vmem:[#allocation2 + $0x2a0] sm:$0xff]
      %v1824 = vld [vmem:[#allocation2 + $0x2a8] sm:$0xff]
      %v1825 = vld [vmem:[#allocation2 + $0x2b0] sm:$0xff]
      %v1826 = vld [vmem:[#allocation2 + $0x2b8] sm:$0xff]
      %v1827 = vld [vmem:[#allocation2 + $0x2c0] sm:$0xff]
      %v1828 = vld [vmem:[#allocation2 + $0x2c8] sm:$0xff]
      %v1829 = vld [vmem:[#allocation2 + $0x2d0] sm:$0xff]
      %v1830 = vld [vmem:[#allocation2 + $0x2d8] sm:$0xff]
      %v1831 = vld [vmem:[#allocation2 + $0x2e0] sm:$0xff]
      %v1832 = vld [vmem:[#allocation2 + $0x2e8] sm:$0xff]
      %v1833 = vld [vmem:[#allocation2 + $0x2f0] sm:$0xff]
      %v1834 = vld [vmem:[#allocation2 + $0x2f8] sm:$0xff]
      %v1835 = vld [vmem:[#allocation2 + $0x300] sm:$0xff]
      %v1836 = vld [vmem:[#allocation2 + $0x308] sm:$0xff]
      %v1837 = vld [vmem:[#allocation2 + $0x310] sm:$0xff]
      %v1838 = vld [vmem:[#allocation2 + $0x318] sm:$0xff]
      %v1839 = vld [vmem:[#allocation2 + $0x320] sm:$0xff]
      %v1840 = vld [vmem:[#allocation2 + $0x328] sm:$0xff]
      %v1841 = vld [vmem:[#allocation2 + $0x330] sm:$0xff]
      %v1842 = vld [vmem:[#allocation2 + $0x338] sm:$0xff]
      %v1843 = vld [vmem:[#allocation2 + $0x340] sm:$0xff]
      %v1844 = vld [vmem:[#allocation2 + $0x348] sm:$0xff]
      %v1845 = vld [vmem:[#allocation2 + $0x350] sm:$0xff]
      %v1846 = vld [vmem:[#allocation2 + $0x358] sm:$0xff]
      %v1847 = vpack.c.bf16 %v1743, %v1739
      %v1848 = vpack.c.bf16 %v1744, %v1740
      %v1849 = vpack.c.bf16 %v1745, %v1741
      %v1850 = vpack.c.bf16 %v1746, %v1742
      %v1851 = vpack.c.bf16 %v1751, %v1747
      %v1852 = vpack.c.bf16 %v1752, %v1748
      %v1853 = vpack.c.bf16 %v1753, %v1749
      %v1854 = vpack.c.bf16 %v1754, %v1750
      %v1855 = vpack.c.bf16 %v1759, %v1755
      %v1856 = vpack.c.bf16 %v1760, %v1756
      %v1857 = vpack.c.bf16 %v1761, %v1757
      %v1858 = vpack.c.bf16 %v1762, %v1758
      %v1859 = vpack.c.bf16 %v1767, %v1763
      %v1860 = vpack.c.bf16 %v1768, %v1764
      %v1861 = vpack.c.bf16 %v1769, %v1765
      %v1862 = vpack.c.bf16 %v1770, %v1766
      %v1863 = vpack.c.bf16 %v1775, %v1771
      %v1864 = vpack.c.bf16 %v1776, %v1772
      %v1865 = vpack.c.bf16 %v1777, %v1773
      %v1866 = vpack.c.bf16 %v1778, %v1774
      %v1867 = vpack.c.bf16 %v1783, %v1779
      %v1868 = vpack.c.bf16 %v1784, %v1780
      %v1869 = vpack.c.bf16 %v1785, %v1781
      %v1870 = vpack.c.bf16 %v1786, %v1782
      %v1871 = vpack.c.bf16 %v1791, %v1787
      %v1872 = vpack.c.bf16 %v1792, %v1788
      %v1873 = vpack.c.bf16 %v1793, %v1789
      %v1874 = vpack.c.bf16 %v1794, %v1790
      %v1875 = vpack.c.bf16 %v1799, %v1795
      %v1876 = vpack.c.bf16 %v1800, %v1796
      %v1877 = vpack.c.bf16 %v1801, %v1797
      %v1878 = vpack.c.bf16 %v1802, %v1798
      %v1879 = vpack.c.bf16 %v1807, %v1803
      %v1880 = vpack.c.bf16 %v1808, %v1804
      %v1881 = vpack.c.bf16 %v1809, %v1805
      %v1882 = vpack.c.bf16 %v1810, %v1806
      %v1883 = vpack.c.bf16 %v1815, %v1811
      %v1884 = vpack.c.bf16 %v1816, %v1812
      %v1885 = vpack.c.bf16 %v1817, %v1813
      %v1886 = vpack.c.bf16 %v1818, %v1814
      %v1887 = vpack.c.bf16 %v1823, %v1819
      %v1888 = vpack.c.bf16 %v1824, %v1820
      %v1889 = vpack.c.bf16 %v1825, %v1821
      %v1890 = vpack.c.bf16 %v1826, %v1822
      %v1891 = vpack.c.bf16 %v1831, %v1827
      %v1892 = vpack.c.bf16 %v1832, %v1828
      %v1893 = vpack.c.bf16 %v1833, %v1829
      %v1894 = vpack.c.bf16 %v1834, %v1830
      %v1895 = vpack.c.bf16 %v1839, %v1835
      %v1896 = vpack.c.bf16 %v1840, %v1836
      %v1897 = vpack.c.bf16 %v1841, %v1837
      %v1898 = vpack.c.bf16 %v1842, %v1838
      %v1899 = vpack.c.bf16 %v1843, %v1843
      %v1900 = vpack.c.bf16 %v1844, %v1844
      %v1901 = vpack.c.bf16 %v1845, %v1845
      %v1902 = vpack.c.bf16 %v1846, %v1846
      %v1904 = vunpack.c.l.b16 %v1738
      %v1905 = vunpack.c.h.b16 %v1738
      %v1906 = vpack.c.b16 %v1904, %v1904
      %v1907 = vpack.c.b16 %v1905, %v1905
      %vm1909 = vcmask 719872
      %v1911 = vsel %vm1909, %v1907, 0
      %v1914 = vsel %vm424, %v1899, 0
      %v1917 = vsel %vm424, %v1900, 0
      %v1920 = vsel %vm424, %v1901, 0
      %v1923 = vsel %vm424, %v1902, 0
      %1925 = vmatprep.subr.bf16.mxu0 %v1848
      %1926 = vmatpush1.bf16.msra.mxu0 %v1847
      %1927 = vmatprep.subr.bf16.mxu0 %v1852
      %1928 = vmatpush1.bf16.msra.mxu0 %v1851
      %1929 = vmatprep.subr.bf16.mxu0 %v1856
      %1930 = vmatpush1.bf16.msra.mxu0 %v1855
      %1931 = vmatprep.subr.bf16.mxu0 %v1860
      %1932 = vmatpush1.bf16.msra.mxu0 %v1859
      %1933 = vmatprep.subr.bf16.mxu0 %v1864
      %1934 = vmatpush1.bf16.msra.mxu0 %v1863
      %1935 = vmatprep.subr.bf16.mxu0 %v1868
      %1936 = vmatpush1.bf16.msra.mxu0 %v1867
      %1937 = vmatprep.subr.bf16.mxu0 %v1872
      %1938 = vmatpush1.bf16.msra.mxu0 %v1871
      %1939 = vmatprep.subr.bf16.mxu0 %v1876
      %1940 = vmatpush1.bf16.msra.mxu0 %v1875
      %1941 = vmatprep.subr.bf16.mxu0 %v1880
      %1942 = vmatpush1.bf16.msra.mxu0 %v1879
      %1943 = vmatprep.subr.bf16.mxu0 %v1884
      %1944 = vmatpush1.bf16.msra.mxu0 %v1883
      %1945 = vmatprep.subr.bf16.mxu0 %v1888
      %1946 = vmatpush1.bf16.msra.mxu0 %v1887
      %1947 = vmatprep.subr.bf16.mxu0 %v1892
      %1948 = vmatpush1.bf16.msra.mxu0 %v1891
      %1949 = vmatprep.subr.bf16.mxu0 %v1896
      %1950 = vmatpush1.bf16.msra.mxu0 %v1895
      %1951 = vmatprep.subr.bf16.mxu0 %v1917
      %1952 = vmatpush1.bf16.msra.mxu0 %v1914
      %1953 = vmatprep.subr.bf16.mxu0 0
      %1954 = vmatpush1.bf16.msra.mxu0 0
      %1955 = vmatprep.subr.bf16.mxu0 0
      %1956 = vmatpush1.bf16.msra.mxu0 0
      %1957 = vmatprep.mubr.bf16.mxu0 %v1911
      %1958 = vmatmul.mubr.bf16.gmra.mrb[0].mxu0 %v1906
      %v1959 = vpop.f32.mrb[0].mxu0
      %v1960 = vadd.f32 0.0, %v1959
      %v1961 = vpop.f32.mrb[0].mxu0
      %v1962 = vadd.f32 0.0, %v1961
      %v1963 = vpop.f32.mrb[0].mxu0
      %v1964 = vpop.f32.mrb[0].mxu0
      %1965 = vdwg.mxu0
      %1966 = vmatprep.subr.bf16.mxu0 %v1850
      %1967 = vmatpush1.bf16.msra.mxu0 %v1849
      %1968 = vmatprep.subr.bf16.mxu0 %v1854
      %1969 = vmatpush1.bf16.msra.mxu0 %v1853
      %1970 = vmatprep.subr.bf16.mxu0 %v1858
      %1971 = vmatpush1.bf16.msra.mxu0 %v1857
      %1972 = vmatprep.subr.bf16.mxu0 %v1862
      %1973 = vmatpush1.bf16.msra.mxu0 %v1861
      %1974 = vmatprep.subr.bf16.mxu0 %v1866
      %1975 = vmatpush1.bf16.msra.mxu0 %v1865
      %1976 = vmatprep.subr.bf16.mxu0 %v1870
      %1977 = vmatpush1.bf16.msra.mxu0 %v1869
      %1978 = vmatprep.subr.bf16.mxu0 %v1874
      %1979 = vmatpush1.bf16.msra.mxu0 %v1873
      %1980 = vmatprep.subr.bf16.mxu0 %v1878
      %1981 = vmatpush1.bf16.msra.mxu0 %v1877
      %1982 = vmatprep.subr.bf16.mxu0 %v1882
      %1983 = vmatpush1.bf16.msra.mxu0 %v1881
      %1984 = vmatprep.subr.bf16.mxu0 %v1886
      %1985 = vmatpush1.bf16.msra.mxu0 %v1885
      %1986 = vmatprep.subr.bf16.mxu0 %v1890
      %1987 = vmatpush1.bf16.msra.mxu0 %v1889
      %1988 = vmatprep.subr.bf16.mxu0 %v1894
      %1989 = vmatpush1.bf16.msra.mxu0 %v1893
      %1990 = vmatprep.subr.bf16.mxu0 %v1898
      %1991 = vmatpush1.bf16.msra.mxu0 %v1897
      %1992 = vmatprep.subr.bf16.mxu0 %v1923
      %1993 = vmatpush1.bf16.msra.mxu0 %v1920
      %1994 = vmatprep.subr.bf16.mxu0 0
      %1995 = vmatpush1.bf16.msra.mxu0 0
      %1996 = vmatprep.subr.bf16.mxu0 0
      %1997 = vmatpush1.bf16.msra.mxu0 0
      %1998 = vmatprep.mubr.bf16.mxu0 %v1911
      %1999 = vmatmul.mubr.bf16.gmra.mrb[0].mxu0 %v1906
      %v2000 = vpop.f32.mrb[0].mxu0
      %v2001 = vadd.f32 0.0, %v2000
      %v2002 = vpop.f32.mrb[0].mxu0
      %v2003 = vadd.f32 0.0, %v2002
      %v2004 = vpop.f32.mrb[0].mxu0
      %v2005 = vpop.f32.mrb[0].mxu0
      %2006 = vdwg.mxu0
      %v2007 = vld [vmem:[%s5] sm:$0xff]
      %2009 = vset.pattern.permute.xlu0 0
      %2010 = vperm.xlu0 %2009, %v2007
      %v2011 = vpop.permute.xlu0 %2010
      %v2013 = vmul.f32 %v1960, %v2011
      %v2014 = vmul.f32 %v1962, %v2011
      %v2015 = vmul.f32 %v2001, %v2011
      %v2016 = vmul.f32 %v2003, %v2011
      %v2017 = vld [vmem:[%s6] sm:$0xff]
      %2019 = vset.pattern.permute.xlu0 0
      %2020 = vperm.xlu0 %2019, %v2017
      %v2021 = vpop.permute.xlu0 %2020
      %v2023 = vadd.f32 %v2013, %v2021
      %v2024 = vadd.f32 %v2014, %v2021
      %v2025 = vadd.f32 %v2015, %v2021
      %v2026 = vadd.f32 %v2016, %v2021
      %v2027 = vmax.f32 %v2023, 0.0
      %v2028 = vmax.f32 %v2024, 0.0
      %v2029 = vmax.f32 %v2025, 0.0
      %v2030 = vmax.f32 %v2026, 0.0
      %v2031 = vld [vmem:[%s7] sm:$0xf]
      %v2032 = vld [vmem:[%s7 + $0x4] sm:$0xf]
      %v2033 = vld [vmem:[%s7 + $0x8] sm:$0xf]
      %v2034 = vld [vmem:[%s7 + $0xc] sm:$0xf]
      %v2035 = vpack.c.bf16 %v2027, %v2027
      %v2036 = vpack.c.bf16 %v2028, %v2028
      %v2037 = vpack.c.bf16 %v2029, %v2029
      %v2038 = vpack.c.bf16 %v2030, %v2030
      %v2043 = vunpack.c.l.b16 %v2031
      %v2044 = vunpack.c.l.b16 %v2032
      %v2045 = vunpack.c.l.b16 %v2033
      %v2046 = vunpack.c.l.b16 %v2034
      %v2047 = vpack.c.b16 %v2044, %v2043
      %v2048 = vpack.c.b16 %v2046, %v2045
      %v2050 = vsel %vm414, %v2047, 0
      %v2053 = vsel %vm414, %v2048, 0
      %v2056 = vsel %vm424, %v2035, 0
      %v2059 = vsel %vm424, %v2036, 0
      %v2062 = vsel %vm424, %v2037, 0
      %v2065 = vsel %vm424, %v2038, 0
      %2067 = vmatprep.subr.bf16.mxu0 %v2059
      %2068 = vmatpush1.bf16.msra.mxu0 %v2056
      %2069 = vmatprep.subr.bf16.mxu0 0
      %2070 = vmatpush1.bf16.msra.mxu0 0
      %2071 = vmatprep.subr.bf16.mxu0 0
      %2072 = vmatpush1.bf16.msra.mxu0 0
      %2073 = vmatprep.subr.bf16.mxu0 0
      %2074 = vmatpush1.bf16.msra.mxu0 0
      %2075 = vmatprep.subr.bf16.mxu0 0
      %2076 = vmatpush1.bf16.msra.mxu0 0
      %2077 = vmatprep.subr.bf16.mxu0 0
      %2078 = vmatpush1.bf16.msra.mxu0 0
      %2079 = vmatprep.subr.bf16.mxu0 0
      %2080 = vmatpush1.bf16.msra.mxu0 0
      %2081 = vmatprep.subr.bf16.mxu0 0
      %2082 = vmatpush1.bf16.msra.mxu0 0
      %2083 = vmatprep.subr.bf16.mxu0 0
      %2084 = vmatpush1.bf16.msra.mxu0 0
      %2085 = vmatprep.subr.bf16.mxu0 0
      %2086 = vmatpush1.bf16.msra.mxu0 0
      %2087 = vmatprep.subr.bf16.mxu0 0
      %2088 = vmatpush1.bf16.msra.mxu0 0
      %2089 = vmatprep.subr.bf16.mxu0 0
      %2090 = vmatpush1.bf16.msra.mxu0 0
      %2091 = vmatprep.subr.bf16.mxu0 0
      %2092 = vmatpush1.bf16.msra.mxu0 0
      %2093 = vmatprep.subr.bf16.mxu0 0
      %2094 = vmatpush1.bf16.msra.mxu0 0
      %2095 = vmatprep.subr.bf16.mxu0 0
      %2096 = vmatpush1.bf16.msra.mxu0 0
      %2097 = vmatprep.subr.bf16.mxu0 0
      %2098 = vmatpush1.bf16.msra.mxu0 0
      %2099 = vmatprep.mubr.bf16.mxu0 0
      %2100 = vmatmul.mubr.bf16.gmra.mrb[0].mxu0 %v2050
      %v2101 = vpop.f32.mrb[0].mxu0
      %v2102 = vadd.f32 0.0, %v2101
      %v2103 = vpop.f32.mrb[0].mxu0
      %v2104 = vadd.f32 0.0, %v2103
      %v2105 = vpop.f32.mrb[0].mxu0
      %v2106 = vadd.f32 0.0, %v2105
      %v2107 = vpop.f32.mrb[0].mxu0
      %v2108 = vadd.f32 0.0, %v2107
      %2109 = vmatprep.mubr.bf16.mxu0 0
      %2110 = vmatmul.mubr.bf16.gmra.mrb[0].mxu0 %v2053
      %v2111 = vpop.f32.mrb[0].mxu0
      %v2112 = vadd.f32 0.0, %v2111
      %v2113 = vpop.f32.mrb[0].mxu0
      %v2114 = vadd.f32 0.0, %v2113
      %v2115 = vpop.f32.mrb[0].mxu0
      %v2116 = vadd.f32 0.0, %v2115
      %v2117 = vpop.f32.mrb[0].mxu0
      %v2118 = vadd.f32 0.0, %v2117
      %2119 = vdwg.mxu0
      %2120 = vmatprep.subr.bf16.mxu0 %v2065
      %2121 = vmatpush1.bf16.msra.mxu0 %v2062
      %2122 = vmatprep.subr.bf16.mxu0 0
      %2123 = vmatpush1.bf16.msra.mxu0 0
      %2124 = vmatprep.subr.bf16.mxu0 0
      %2125 = vmatpush1.bf16.msra.mxu0 0
      %2126 = vmatprep.subr.bf16.mxu0 0
      %2127 = vmatpush1.bf16.msra.mxu0 0
      %2128 = vmatprep.subr.bf16.mxu0 0
      %2129 = vmatpush1.bf16.msra.mxu0 0
      %2130 = vmatprep.subr.bf16.mxu0 0
      %2131 = vmatpush1.bf16.msra.mxu0 0
      %2132 = vmatprep.subr.bf16.mxu0 0
      %2133 = vmatpush1.bf16.msra.mxu0 0
      %2134 = vmatprep.subr.bf16.mxu0 0
      %2135 = vmatpush1.bf16.msra.mxu0 0
      %2136 = vmatprep.subr.bf16.mxu0 0
      %2137 = vmatpush1.bf16.msra.mxu0 0
      %2138 = vmatprep.subr.bf16.mxu0 0
      %2139 = vmatpush1.bf16.msra.mxu0 0
      %2140 = vmatprep.subr.bf16.mxu0 0
      %2141 = vmatpush1.bf16.msra.mxu0 0
      %2142 = vmatprep.subr.bf16.mxu0 0
      %2143 = vmatpush1.bf16.msra.mxu0 0
      %2144 = vmatprep.subr.bf16.mxu0 0
      %2145 = vmatpush1.bf16.msra.mxu0 0
      %2146 = vmatprep.subr.bf16.mxu0 0
      %2147 = vmatpush1.bf16.msra.mxu0 0
      %2148 = vmatprep.subr.bf16.mxu0 0
      %2149 = vmatpush1.bf16.msra.mxu0 0
      %2150 = vmatprep.subr.bf16.mxu0 0
      %2151 = vmatpush1.bf16.msra.mxu0 0
      %2152 = vmatprep.mubr.bf16.mxu0 0
      %2153 = vmatmul.mubr.bf16.gmra.mrb[0].mxu0 %v2050
      %v2154 = vpop.f32.mrb[0].mxu0
      %v2155 = vadd.f32 0.0, %v2154
      %v2156 = vpop.f32.mrb[0].mxu0
      %v2157 = vadd.f32 0.0, %v2156
      %v2158 = vpop.f32.mrb[0].mxu0
      %v2159 = vadd.f32 0.0, %v2158
      %v2160 = vpop.f32.mrb[0].mxu0
      %v2161 = vadd.f32 0.0, %v2160
      %2162 = vmatprep.mubr.bf16.mxu0 0
      %2163 = vmatmul.mubr.bf16.gmra.mrb[0].mxu0 %v2053
      %v2164 = vpop.f32.mrb[0].mxu0
      %v2165 = vadd.f32 0.0, %v2164
      %v2166 = vpop.f32.mrb[0].mxu0
      %v2167 = vadd.f32 0.0, %v2166
      %v2168 = vpop.f32.mrb[0].mxu0
      %v2169 = vadd.f32 0.0, %v2168
      %v2170 = vpop.f32.mrb[0].mxu0
      %v2171 = vadd.f32 0.0, %v2170
      %2172 = vdwg.mxu0
      %v2173 = vld [vmem:[%s8] sm:$0xff]
      %v2174 = vld [vmem:[%s8 + $0x8] sm:$0xff]
      %v2175 = vld [vmem:[%s8 + $0x10] sm:$0xff]
      %v2176 = vld [vmem:[%s8 + $0x18] sm:$0xff]
      %2178 = vset.pattern.permute.xlu0 0
      %2179 = vperm.xlu0 %2178, %v2173
      %v2180 = vpop.permute.xlu0 %2179
      %2183 = vset.pattern.permute.xlu0 0
      %2184 = vperm.xlu0 %2183, %v2174
      %v2185 = vpop.permute.xlu0 %2184
      %2188 = vset.pattern.permute.xlu0 0
      %2189 = vperm.xlu0 %2188, %v2175
      %v2190 = vpop.permute.xlu0 %2189
      %2193 = vset.pattern.permute.xlu0 0
      %2194 = vperm.xlu0 %2193, %v2176
      %v2195 = vpop.permute.xlu0 %2194
      %v2197 = vmul.f32 %v2102, %v2180
      %v2198 = vmul.f32 %v2104, %v2180
      %v2199 = vmul.f32 %v2155, %v2180
      %v2200 = vmul.f32 %v2157, %v2180
      %v2201 = vmul.f32 %v2106, %v2185
      %v2202 = vmul.f32 %v2108, %v2185
      %v2203 = vmul.f32 %v2159, %v2185
      %v2204 = vmul.f32 %v2161, %v2185
      %v2205 = vmul.f32 %v2112, %v2190
      %v2206 = vmul.f32 %v2114, %v2190
      %v2207 = vmul.f32 %v2165, %v2190
      %v2208 = vmul.f32 %v2167, %v2190
      %v2209 = vmul.f32 %v2116, %v2195
      %v2210 = vmul.f32 %v2118, %v2195
      %v2211 = vmul.f32 %v2169, %v2195
      %v2212 = vmul.f32 %v2171, %v2195
      %v2213 = vld [vmem:[%s9] sm:$0xff]
      %v2214 = vld [vmem:[%s9 + $0x8] sm:$0xff]
      %v2215 = vld [vmem:[%s9 + $0x10] sm:$0xff]
      %v2216 = vld [vmem:[%s9 + $0x18] sm:$0xff]
      %2218 = vset.pattern.permute.xlu0 0
      %2219 = vperm.xlu0 %2218, %v2213
      %v2220 = vpop.permute.xlu0 %2219
      %2223 = vset.pattern.permute.xlu0 0
      %2224 = vperm.xlu0 %2223, %v2214
      %v2225 = vpop.permute.xlu0 %2224
      %2228 = vset.pattern.permute.xlu0 0
      %2229 = vperm.xlu0 %2228, %v2215
      %v2230 = vpop.permute.xlu0 %2229
      %2233 = vset.pattern.permute.xlu0 0
      %2234 = vperm.xlu0 %2233, %v2216
      %v2235 = vpop.permute.xlu0 %2234
      %v2237 = vadd.f32 %v2197, %v2220
      %v2238 = vadd.f32 %v2198, %v2220
      %v2239 = vadd.f32 %v2199, %v2220
      %v2240 = vadd.f32 %v2200, %v2220
      %v2241 = vadd.f32 %v2201, %v2225
      %v2242 = vadd.f32 %v2202, %v2225
      %v2243 = vadd.f32 %v2203, %v2225
      %v2244 = vadd.f32 %v2204, %v2225
      %v2245 = vadd.f32 %v2205, %v2230
      %v2246 = vadd.f32 %v2206, %v2230
      %v2247 = vadd.f32 %v2207, %v2230
      %v2248 = vadd.f32 %v2208, %v2230
      %v2249 = vadd.f32 %v2209, %v2235
      %v2250 = vadd.f32 %v2210, %v2235
      %v2251 = vadd.f32 %v2211, %v2235
      %v2252 = vadd.f32 %v2212, %v2235
      %v2253 = vmax.f32 %v2237, 0.0
      %v2254 = vmax.f32 %v2238, 0.0
      %v2255 = vmax.f32 %v2239, 0.0
      %v2256 = vmax.f32 %v2240, 0.0
      %v2257 = vmax.f32 %v2241, 0.0
      %v2258 = vmax.f32 %v2242, 0.0
      %v2259 = vmax.f32 %v2243, 0.0
      %v2260 = vmax.f32 %v2244, 0.0
      %v2261 = vmax.f32 %v2245, 0.0
      %v2262 = vmax.f32 %v2246, 0.0
      %v2263 = vmax.f32 %v2247, 0.0
      %v2264 = vmax.f32 %v2248, 0.0
      %v2265 = vmax.f32 %v2249, 0.0
      %v2266 = vmax.f32 %v2250, 0.0
      %v2267 = vmax.f32 %v2251, 0.0
      %v2268 = vmax.f32 %v2252, 0.0
      %v2269 = vld [vmem:[%s386] sm:$0xff]
      %v2270 = vld [vmem:[%s386 + $0x8] sm:$0xff]
      %v2271 = vld [vmem:[%s386 + $0x10] sm:$0xff]
      %v2272 = vld [vmem:[%s386 + $0x18] sm:$0xff]
      %v2273 = vld [vmem:[%s386 + $0x20] sm:$0xff]
      %v2274 = vld [vmem:[%s386 + $0x28] sm:$0xff]
      %v2275 = vld [vmem:[%s386 + $0x30] sm:$0xff]
      %v2276 = vld [vmem:[%s386 + $0x38] sm:$0xff]
      %v2277 = vld [vmem:[%s386 + $0x40] sm:$0xff]
      %v2278 = vld [vmem:[%s386 + $0x48] sm:$0xff]
      %v2279 = vld [vmem:[%s386 + $0x50] sm:$0xff]
      %v2280 = vld [vmem:[%s386 + $0x58] sm:$0xff]
      %v2281 = vld [vmem:[%s386 + $0x60] sm:$0xff]
      %v2282 = vld [vmem:[%s386 + $0x68] sm:$0xff]
      %v2283 = vld [vmem:[%s386 + $0x70] sm:$0xff]
      %v2284 = vld [vmem:[%s386 + $0x78] sm:$0xff]
      %v2285 = vadd.f32 %v2269, %v2253
      %v2286 = vadd.f32 %v2270, %v2254
      %v2287 = vadd.f32 %v2271, %v2255
      %v2288 = vadd.f32 %v2272, %v2256
      %v2289 = vadd.f32 %v2273, %v2257
      %v2290 = vadd.f32 %v2274, %v2258
      %v2291 = vadd.f32 %v2275, %v2259
      %v2292 = vadd.f32 %v2276, %v2260
      %v2293 = vadd.f32 %v2277, %v2261
      %v2294 = vadd.f32 %v2278, %v2262
      %v2295 = vadd.f32 %v2279, %v2263
      %v2296 = vadd.f32 %v2280, %v2264
      %v2297 = vadd.f32 %v2281, %v2265
      %v2298 = vadd.f32 %v2282, %v2266
      %v2299 = vadd.f32 %v2283, %v2267
      %v2300 = vadd.f32 %v2284, %v2268
      %2301 = vst [vmem:[%s386] sm:$0xff] %v2285
      %2302 = vst [vmem:[%s386 + $0x8] sm:$0xff] %v2286
      %2303 = vst [vmem:[%s386 + $0x10] sm:$0xff] %v2287
      %2304 = vst [vmem:[%s386 + $0x18] sm:$0xff] %v2288
      %2305 = vst [vmem:[%s386 + $0x20] sm:$0xff] %v2289
      %2306 = vst [vmem:[%s386 + $0x28] sm:$0xff] %v2290
      %2307 = vst [vmem:[%s386 + $0x30] sm:$0xff] %v2291
      %2308 = vst [vmem:[%s386 + $0x38] sm:$0xff] %v2292
      %2309 = vst [vmem:[%s386 + $0x40] sm:$0xff] %v2293
      %2310 = vst [vmem:[%s386 + $0x48] sm:$0xff] %v2294
      %2311 = vst [vmem:[%s386 + $0x50] sm:$0xff] %v2295
      %2312 = vst [vmem:[%s386 + $0x58] sm:$0xff] %v2296
      %2313 = vst [vmem:[%s386 + $0x60] sm:$0xff] %v2297
      %2314 = vst [vmem:[%s386 + $0x68] sm:$0xff] %v2298
      %2315 = vst [vmem:[%s386 + $0x70] sm:$0xff] %v2299
      %2316 = vst [vmem:[%s386 + $0x78] sm:$0xff] %v2300
      %p2317 = scmp.lt.s32.totalorder %s22, 1
      %s2318 = scalar_select %p2317, %s22, 1
      %s2319 = smul.addr %s2318, 16
      %s2320 = smul.addr %s2319, 8
      %s2321 = scalar_lea.vmem %s11, %s2320
      // Predicated region
      $region65: #{bottleneck_forward.1} parent=63 // pred_check
        %p2322 = pneg %p276
      $region66: #{bottleneck_forward.1} parent=63 // pred_check_branch
        %2324 = sbr.rel (%p2322) target = $region68
      $region67: #{bottleneck_forward.1} parent=63 // pred_region
        _
      $region68: #{bottleneck_forward.1} parent=63 // pred_fallthru
        _
    $region64: #{bottleneck_forward.1} parent=5 // pred_fallthru
      _
    %p2325 = scmp.le.s32.totalorder 2, %s17
    // Predicated region
    $region69: #{bottleneck_forward.1} parent=5 // pred_check
      %p2326 = pneg %p2325
    $region70: #{bottleneck_forward.1} parent=5 // pred_check_branch
      %2328 = sbr.rel (%p2326) target = $region72
    $region71: #{bottleneck_forward.1} parent=5 // pred_region
      %s2329 = ssub.s32 %s17, 2
      // Predicated region
      $region73: #{bottleneck_forward.1} parent=71 // pred_check
        %p2330 = pneg %p282
      $region74: #{bottleneck_forward.1} parent=71 // pred_check_branch
        %2332 = sbr.rel (%p2330) target = $region76
      $region75: #{bottleneck_forward.1} parent=71 // pred_region
        %p2333 = scmp.lt.s32.totalorder %s23, 1
        %s2334 = scalar_select %p2333, %s23, 1
        %s2335 = smul.addr %s2334, 16
        %s2336 = smul.addr %s2335, 8
        %s2337 = scalar_lea.vmem %s11, %s2336
      $region76: #{bottleneck_forward.1} parent=71 // pred_fallthru
        _
    $region72: #{bottleneck_forward.1} parent=5 // pred_fallthru
      _
  $region6: #{bottleneck_forward.1} parent=0 // loop_footer
    %s21 = sadd.s32 1, %s17
  $region7: #{bottleneck_forward.1} parent=0 // loop_footer_branch
    %16 = sbr.rel target = $region3
  $region8: #{bottleneck_forward.1} parent=0 // loop_exit
    _

</llo_original>
